<compile_context>
chip_gen: v7x
topology: tpu7x:2x2x1
jax: 0.10.0
libtpu: 0.0.40
codegen_flags: <defaults>
</compile_context>

<pallas_src>
import functools

import jax
import jax.numpy as jnp
import numpy as np
from jax import lax
from jax.experimental import pallas as pl
from jax.experimental.pallas import tpu as pltpu

# Hyper-parameters implied by the module (chosen small & consistent).
VOCAB_SIZE = 50
EMB_DIM = 201          # glove dim hard-coded in create_emb_layer
EMB_PAD = 256          # K padded to two clean 128-lane MXU passes
HIDDEN_SIZE = 32
OUTPUT_SIZE = 4
LSTM_DROPOUT = 0.5     # eval-mode dropout => identity in forward
BATCH = 2
SEQ = 8
OUT_PAD = 128          # lane-dense padded width of the FC output
SUBLANE = 8            # f32 sublane tile


def lstm_fc_kernel(ids_ref, emb_ref, w_ih_ref, w_hh_ref, b_ref,
                   w_fc_ref, b_fc_ref, out_ref, x_scratch,
                   *, seq_len, batch, batch_pad, hidden):
    """Embedding gather + whole LSTM recurrence + FC head, single invocation.

    ids_ref  : SMEM [B*S] int32, row-major (id of (b, t) at b*S + t)
    emb_ref  : VMEM [V, 1, EMB_PAD]  frozen embedding table (zero-padded cols)
    w_ih_ref : [EMB_PAD, 4H]   w_hh_ref: [H, 4H]   b_ref: [1, 4H]
    w_fc_ref : [H, 128]        b_fc_ref: [1, 128]  (zero-padded past OUTPUT_SIZE)
    out_ref  : [Bp, 128]       lane-dense padded FC output (Bp = batch padded to 8)
    x_scratch: VMEM [S*Bp, EMB_PAD] time-major embeddings (row = t*Bp + b)
    """
    S, B, Bp, H = seq_len, batch, batch_pad, hidden

    # ---- Fused embedding gather: SMEM scalar ids -> dynamic VMEM row reads ----
    x_scratch[...] = jnp.zeros_like(x_scratch)          # covers padded batch rows
    for t in range(S):
        for b in range(B):
            idx = ids_ref[b * S + t]                    # SMEM scalar read
            x_scratch[pl.ds(t * Bp + b, 1), :] = emb_ref[idx]   # [1, EMB_PAD]

    # ---- Prologue: input projection for ALL time steps as one MXU matmul ----
    gx = (jnp.dot(x_scratch[...], w_ih_ref[...],
                  preferred_element_type=jnp.float32)
          + b_ref[...])                                 # [S*Bp, 4H]

    # NOTE: Mosaic keeps this small [H, 4H] RHS resident in vregs/VMEM; explicit
    # pltpu.matmul_push_rhs staging is a further (unmeasured) option.
    w_hh = w_hh_ref[...]

    # Lane mask selecting the "g" (cell-candidate) gate lanes.
    lane = lax.broadcasted_iota(jnp.int32, (Bp, 4 * H), 1)
    is_g = jnp.logical_and(lane >= 2 * H, lane < 3 * H)

    h = jnp.zeros((Bp, H), jnp.float32)
    c = jnp.zeros((Bp, H), jnp.float32)

    # Fully unrolled recurrence (S small & static): no per-step grid overhead.
    for t in range(S):
        pre = gx[t * Bp:(t + 1) * Bp, :] + jnp.dot(
            h, w_hh, preferred_element_type=jnp.float32)         # [Bp, 4H]
        # Single EUP pass per step: tanh(x) = 2*sigmoid(2x) - 1 on the g lanes.
        pre2 = jnp.where(is_g, pre + pre, pre)
        sg = jax.nn.sigmoid(pre2)
        act = jnp.where(is_g, sg + sg - 1.0, sg)
        i_g = act[:, 0 * H:1 * H]
        f_g = act[:, 1 * H:2 * H]
        g_g = act[:, 2 * H:3 * H]
        o_g = act[:, 3 * H:4 * H]
        c = f_g * c + i_g * g_g
        h = o_g * jnp.tanh(c)

    # FC head on the final hidden state; lane-dense unmasked [Bp, 128] store.
    out_ref[...] = (jnp.dot(h, w_fc_ref[...],
                            preferred_element_type=jnp.float32)
                    + b_fc_ref[...]).astype(out_ref.dtype)
    # TODO(synk): nn.Dropout in eval mode is identity; training-mode dropout
    # (pltpu.prng_seed/prng_random_bits mask + 1/(1-p) scale) is not applied.


def simple_lstm_forward(token_ids, params):
    """token_ids: int32 [B, S]. Returns [B, OUTPUT_SIZE] float32."""
    emb3d = params["embedding"]              # [V, 1, EMB_PAD]
    w_ih = params["w_ih"]                    # [EMB_PAD, 4H]
    w_hh = params["w_hh"]                    # [H, 4H]
    b = params["b"]                          # [1, 4H]
    w_fc = params["w_fc"]                    # [H, OUT_PAD]
    b_fc = params["b_fc"]                    # [1, OUT_PAD]

    B, S = token_ids.shape
    V, _, E = emb3d.shape
    H = w_hh.shape[0]
    Bp = max(SUBLANE, ((B + SUBLANE - 1) // SUBLANE) * SUBLANE)

    # Only per-call glue left: flatten the 16 int32 ids for SMEM scalar prefetch.
    ids_flat = token_ids.reshape(B * S).astype(jnp.int32)

    kernel = functools.partial(lstm_fc_kernel, seq_len=S, batch=B,
                               batch_pad=Bp, hidden=H)

    out_pad = pl.pallas_call(
        kernel,
        out_shape=jax.ShapeDtypeStruct((Bp, OUT_PAD), jnp.float32),
        grid_spec=pltpu.PrefetchScalarGridSpec(
            num_scalar_prefetch=1,                   # ids -> SMEM
            grid=(1,),                               # single invocation
            in_specs=[
                pl.BlockSpec((V, 1, E), lambda i, ids: (0, 0, 0)),     # emb table
                pl.BlockSpec((E, 4 * H), lambda i, ids: (0, 0)),       # w_ih
                pl.BlockSpec((H, 4 * H), lambda i, ids: (0, 0)),       # w_hh
                pl.BlockSpec((1, 4 * H), lambda i, ids: (0, 0)),       # bias
                pl.BlockSpec((H, OUT_PAD), lambda i, ids: (0, 0)),     # w_fc
                pl.BlockSpec((1, OUT_PAD), lambda i, ids: (0, 0)),     # b_fc
            ],
            out_specs=pl.BlockSpec((Bp, OUT_PAD), lambda i, ids: (0, 0)),
            scratch_shapes=[pltpu.VMEM((S * Bp, E), jnp.float32)],     # gathered x
        ),
        compiler_params=pltpu.CompilerParams(
            dimension_semantics=("arbitrary",),      # sequential recurrence
        ),
    )(ids_flat, emb3d, w_ih, w_hh, b, w_fc, b_fc)

    return out_pad[:B, :OUTPUT_SIZE]


def make_params(key):
    """Deterministic synthetic parameters, pre-padded ONCE for the kernel."""
    ks = jax.random.split(key, 7)
    H, E, Ep, O, V = HIDDEN_SIZE, EMB_DIM, EMB_PAD, OUTPUT_SIZE, VOCAB_SIZE
    scale = 1.0 / np.sqrt(H)

    emb = jax.random.normal(ks[0], (V, E), jnp.float32) * 0.1
    emb_pad = jnp.zeros((V, 1, Ep), jnp.float32).at[:, 0, :E].set(emb)

    w_ih = jax.random.uniform(ks[1], (E, 4 * H), jnp.float32, -scale, scale)
    w_ih_pad = jnp.zeros((Ep, 4 * H), jnp.float32).at[:E, :].set(w_ih)

    w_fc = jax.random.uniform(ks[5], (H, O), jnp.float32, -scale, scale)
    w_fc_pad = jnp.zeros((H, OUT_PAD), jnp.float32).at[:, :O].set(w_fc)
    b_fc = jax.random.uniform(ks[6], (1, O), jnp.float32, -scale, scale)
    b_fc_pad = jnp.zeros((1, OUT_PAD), jnp.float32).at[:, :O].set(b_fc)

    return {
        "embedding": emb_pad,                         # [V, 1, 256]
        "w_ih": w_ih_pad,                             # [256, 4H]
        "w_hh": jax.random.uniform(ks[2], (H, 4 * H), jnp.float32, -scale, scale),
        "b": (jax.random.uniform(ks[3], (1, 4 * H), jnp.float32, -scale, scale)
              + jax.random.uniform(ks[4], (1, 4 * H), jnp.float32, -scale, scale)),
        "w_fc": w_fc_pad,                             # [H, 128]
        "b_fc": b_fc_pad,                             # [1, 128]
    }


def reference_forward(token_ids, params):
    """Pure-JAX reference (lax.scan LSTM) to sanity-check the kernel."""
    emb_tbl = params["embedding"][:, 0, :]            # [V, EMB_PAD] (zero-padded)
    emb = jnp.take(emb_tbl, token_ids, axis=0)        # [B, S, EMB_PAD]
    H = HIDDEN_SIZE

    def step(carry, x_t):
        h, c = carry
        gates = x_t @ params["w_ih"] + h @ params["w_hh"] + params["b"]
        i = jax.nn.sigmoid(gates[:, 0 * H:1 * H])
        f = jax.nn.sigmoid(gates[:, 1 * H:2 * H])
        g = jnp.tanh(gates[:, 2 * H:3 * H])
        o = jax.nn.sigmoid(gates[:, 3 * H:4 * H])
        c = f * c + i * g
        h = o * jnp.tanh(c)
        return (h, c), None

    B = token_ids.shape[0]
    init = (jnp.zeros((B, H), jnp.float32), jnp.zeros((B, H), jnp.float32))
    (h, _), _ = lax.scan(step, init, jnp.swapaxes(emb, 0, 1))
    out = h @ params["w_fc"] + params["b_fc"]
    return out[:, :OUTPUT_SIZE]


if __name__ == "__main__":
    key = jax.random.PRNGKey(0)
    k_param, k_ids = jax.random.split(key)
    params = make_params(k_param)
    token_ids = jax.random.randint(k_ids, (BATCH, SEQ), 0, VOCAB_SIZE, jnp.int32)

    out = jax.block_until_ready(simple_lstm_forward(token_ids, params))
    ref = jax.block_until_ready(reference_forward(token_ids, params))
    # Slightly relaxed tolerance: kernel uses tanh(x)=2*sigmoid(2x)-1 for the
    # cell-candidate gate, which differs from jnp.tanh by a few f32 ULPs/step.
    np.testing.assert_allclose(np.asarray(out), np.asarray(ref),
                               atol=1e-4, rtol=1e-4)

    print("KERNEL_OK")
</pallas_src>

<mosaic_0001>
module attributes {stable_mosaic.version = 11 : i64} {
  func.func @lstm_fc_kernel(%arg0: i32, %arg1: memref<16xi32, #tpu.memory_space<smem>>, %arg2: memref<50x1x256xf32, #tpu.memory_space<vmem>>, %arg3: memref<256x128xf32, #tpu.memory_space<vmem>>, %arg4: memref<32x128xf32, #tpu.memory_space<vmem>>, %arg5: memref<1x128xf32, #tpu.memory_space<vmem>>, %arg6: memref<32x128xf32, #tpu.memory_space<vmem>>, %arg7: memref<1x128xf32, #tpu.memory_space<vmem>>, %arg8: memref<8x128xf32, #tpu.memory_space<vmem>>, %arg9: memref<64x256xf32, #tpu.memory_space<vmem>>) attributes {dimension_semantics = [#tpu.dimension_semantics<arbitrary>], iteration_bounds = array<i64: 1>, scalar_prefetch = 1 : i64, scratch_operands = 1 : i64, tpu.core_type = #tpu.core_type<tc>, window_params = [{pipeline_mode = #tpu.pipeline_mode<synchronous>, transform_indices = @transform_0, window_bounds = array<i64: 50, 1, 256>}, {pipeline_mode = #tpu.pipeline_mode<synchronous>, transform_indices = @transform_1, window_bounds = array<i64: 256, 128>}, {pipeline_mode = #tpu.pipeline_mode<synchronous>, transform_indices = @transform_2, window_bounds = array<i64: 32, 128>}, {pipeline_mode = #tpu.pipeline_mode<synchronous>, transform_indices = @transform_3, window_bounds = array<i64: 1, 128>}, {pipeline_mode = #tpu.pipeline_mode<synchronous>, transform_indices = @transform_4, window_bounds = array<i64: 32, 128>}, {pipeline_mode = #tpu.pipeline_mode<synchronous>, transform_indices = @transform_5, window_bounds = array<i64: 1, 128>}, {pipeline_mode = #tpu.pipeline_mode<synchronous>, transform_indices = @transform_6, window_bounds = array<i64: 8, 128>}]} {
    %cst = arith.constant 0.000000e+00 : f32
    %0 = vector.broadcast %cst : f32 to vector<64x256xf32>
    %c0 = arith.constant 0 : index
    %c0_0 = arith.constant 0 : index
    %1 = vector.load %arg9[%c0, %c0_0] : memref<64x256xf32, #tpu.memory_space<vmem>>, vector<64x256xf32>
    tpu.vector_store %arg9[%c0, %c0_0], %0 {strides = array<i32>} : memref<64x256xf32, #tpu.memory_space<vmem>>, vector<64x256xf32>,
    %c0_1 = arith.constant 0 : index
    %2 = memref.load %arg1[%c0_1] : memref<16xi32, #tpu.memory_space<smem>>
    %3 = arith.index_cast %2 : i32 to index
    %c0_2 = arith.constant 0 : index
    %c0_3 = arith.constant 0 : index
    %4 = vector.load %arg2[%3, %c0_2, %c0_3] : memref<50x1x256xf32, #tpu.memory_space<vmem>>, vector<1x1x256xf32>
    %5 = vector.shape_cast %4 : vector<1x1x256xf32> to vector<1x256xf32>
    %c0_4 = arith.constant 0 : index
    %c0_5 = arith.constant 0 : index
    %6 = vector.load %arg9[%c0_4, %c0_5] : memref<64x256xf32, #tpu.memory_space<vmem>>, vector<1x256xf32>
    tpu.vector_store %arg9[%c0_4, %c0_5], %5 {strides = array<i32>} : memref<64x256xf32, #tpu.memory_space<vmem>>, vector<1x256xf32>,
    %c8 = arith.constant 8 : index
    %7 = memref.load %arg1[%c8] : memref<16xi32, #tpu.memory_space<smem>>
    %8 = arith.index_cast %7 : i32 to index
    %c0_6 = arith.constant 0 : index
    %c0_7 = arith.constant 0 : index
    %9 = vector.load %arg2[%8, %c0_6, %c0_7] : memref<50x1x256xf32, #tpu.memory_space<vmem>>, vector<1x1x256xf32>
    %10 = vector.shape_cast %9 : vector<1x1x256xf32> to vector<1x256xf32>
    %c1 = arith.constant 1 : index
    %c0_8 = arith.constant 0 : index
    %11 = vector.load %arg9[%c1, %c0_8] : memref<64x256xf32, #tpu.memory_space<vmem>>, vector<1x256xf32>
    tpu.vector_store %arg9[%c1, %c0_8], %10 {strides = array<i32>} : memref<64x256xf32, #tpu.memory_space<vmem>>, vector<1x256xf32>,
    %c1_9 = arith.constant 1 : index
    %12 = memref.load %arg1[%c1_9] : memref<16xi32, #tpu.memory_space<smem>>
    %13 = arith.index_cast %12 : i32 to index
    %c0_10 = arith.constant 0 : index
    %c0_11 = arith.constant 0 : index
    %14 = vector.load %arg2[%13, %c0_10, %c0_11] : memref<50x1x256xf32, #tpu.memory_space<vmem>>, vector<1x1x256xf32>
    %15 = vector.shape_cast %14 : vector<1x1x256xf32> to vector<1x256xf32>
    %c8_12 = arith.constant 8 : index
    %c0_13 = arith.constant 0 : index
    %16 = vector.load %arg9[%c8_12, %c0_13] : memref<64x256xf32, #tpu.memory_space<vmem>>, vector<1x256xf32>
    tpu.vector_store %arg9[%c8_12, %c0_13], %15 {strides = array<i32>} : memref<64x256xf32, #tpu.memory_space<vmem>>, vector<1x256xf32>,
    %c9 = arith.constant 9 : index
    %17 = memref.load %arg1[%c9] : memref<16xi32, #tpu.memory_space<smem>>
    %18 = arith.index_cast %17 : i32 to index
    %c0_14 = arith.constant 0 : index
    %c0_15 = arith.constant 0 : index
    %19 = vector.load %arg2[%18, %c0_14, %c0_15] : memref<50x1x256xf32, #tpu.memory_space<vmem>>, vector<1x1x256xf32>
    %20 = vector.shape_cast %19 : vector<1x1x256xf32> to vector<1x256xf32>
    %c9_16 = arith.constant 9 : index
    %c0_17 = arith.constant 0 : index
    %21 = vector.load %arg9[%c9_16, %c0_17] : memref<64x256xf32, #tpu.memory_space<vmem>>, vector<1x256xf32>
    tpu.vector_store %arg9[%c9_16, %c0_17], %20 {strides = array<i32>} : memref<64x256xf32, #tpu.memory_space<vmem>>, vector<1x256xf32>,
    %c2 = arith.constant 2 : index
    %22 = memref.load %arg1[%c2] : memref<16xi32, #tpu.memory_space<smem>>
    %23 = arith.index_cast %22 : i32 to index
    %c0_18 = arith.constant 0 : index
    %c0_19 = arith.constant 0 : index
    %24 = vector.load %arg2[%23, %c0_18, %c0_19] : memref<50x1x256xf32, #tpu.memory_space<vmem>>, vector<1x1x256xf32>
    %25 = vector.shape_cast %24 : vector<1x1x256xf32> to vector<1x256xf32>
    %c16 = arith.constant 16 : index
    %c0_20 = arith.constant 0 : index
    %26 = vector.load %arg9[%c16, %c0_20] : memref<64x256xf32, #tpu.memory_space<vmem>>, vector<1x256xf32>
    tpu.vector_store %arg9[%c16, %c0_20], %25 {strides = array<i32>} : memref<64x256xf32, #tpu.memory_space<vmem>>, vector<1x256xf32>,
    %c10 = arith.constant 10 : index
    %27 = memref.load %arg1[%c10] : memref<16xi32, #tpu.memory_space<smem>>
    %28 = arith.index_cast %27 : i32 to index
    %c0_21 = arith.constant 0 : index
    %c0_22 = arith.constant 0 : index
    %29 = vector.load %arg2[%28, %c0_21, %c0_22] : memref<50x1x256xf32, #tpu.memory_space<vmem>>, vector<1x1x256xf32>
    %30 = vector.shape_cast %29 : vector<1x1x256xf32> to vector<1x256xf32>
    %c17 = arith.constant 17 : index
    %c0_23 = arith.constant 0 : index
    %31 = vector.load %arg9[%c17, %c0_23] : memref<64x256xf32, #tpu.memory_space<vmem>>, vector<1x256xf32>
    tpu.vector_store %arg9[%c17, %c0_23], %30 {strides = array<i32>} : memref<64x256xf32, #tpu.memory_space<vmem>>, vector<1x256xf32>,
    %c3 = arith.constant 3 : index
    %32 = memref.load %arg1[%c3] : memref<16xi32, #tpu.memory_space<smem>>
    %33 = arith.index_cast %32 : i32 to index
    %c0_24 = arith.constant 0 : index
    %c0_25 = arith.constant 0 : index
    %34 = vector.load %arg2[%33, %c0_24, %c0_25] : memref<50x1x256xf32, #tpu.memory_space<vmem>>, vector<1x1x256xf32>
    %35 = vector.shape_cast %34 : vector<1x1x256xf32> to vector<1x256xf32>
    %c24 = arith.constant 24 : index
    %c0_26 = arith.constant 0 : index
    %36 = vector.load %arg9[%c24, %c0_26] : memref<64x256xf32, #tpu.memory_space<vmem>>, vector<1x256xf32>
    tpu.vector_store %arg9[%c24, %c0_26], %35 {strides = array<i32>} : memref<64x256xf32, #tpu.memory_space<vmem>>, vector<1x256xf32>,
    %c11 = arith.constant 11 : index
    %37 = memref.load %arg1[%c11] : memref<16xi32, #tpu.memory_space<smem>>
    %38 = arith.index_cast %37 : i32 to index
    %c0_27 = arith.constant 0 : index
    %c0_28 = arith.constant 0 : index
    %39 = vector.load %arg2[%38, %c0_27, %c0_28] : memref<50x1x256xf32, #tpu.memory_space<vmem>>, vector<1x1x256xf32>
    %40 = vector.shape_cast %39 : vector<1x1x256xf32> to vector<1x256xf32>
    %c25 = arith.constant 25 : index
    %c0_29 = arith.constant 0 : index
    %41 = vector.load %arg9[%c25, %c0_29] : memref<64x256xf32, #tpu.memory_space<vmem>>, vector<1x256xf32>
    tpu.vector_store %arg9[%c25, %c0_29], %40 {strides = array<i32>} : memref<64x256xf32, #tpu.memory_space<vmem>>, vector<1x256xf32>,
    %c4 = arith.constant 4 : index
    %42 = memref.load %arg1[%c4] : memref<16xi32, #tpu.memory_space<smem>>
    %43 = arith.index_cast %42 : i32 to index
    %c0_30 = arith.constant 0 : index
    %c0_31 = arith.constant 0 : index
    %44 = vector.load %arg2[%43, %c0_30, %c0_31] : memref<50x1x256xf32, #tpu.memory_space<vmem>>, vector<1x1x256xf32>
    %45 = vector.shape_cast %44 : vector<1x1x256xf32> to vector<1x256xf32>
    %c32 = arith.constant 32 : index
    %c0_32 = arith.constant 0 : index
    %46 = vector.load %arg9[%c32, %c0_32] : memref<64x256xf32, #tpu.memory_space<vmem>>, vector<1x256xf32>
    tpu.vector_store %arg9[%c32, %c0_32], %45 {strides = array<i32>} : memref<64x256xf32, #tpu.memory_space<vmem>>, vector<1x256xf32>,
    %c12 = arith.constant 12 : index
    %47 = memref.load %arg1[%c12] : memref<16xi32, #tpu.memory_space<smem>>
    %48 = arith.index_cast %47 : i32 to index
    %c0_33 = arith.constant 0 : index
    %c0_34 = arith.constant 0 : index
    %49 = vector.load %arg2[%48, %c0_33, %c0_34] : memref<50x1x256xf32, #tpu.memory_space<vmem>>, vector<1x1x256xf32>
    %50 = vector.shape_cast %49 : vector<1x1x256xf32> to vector<1x256xf32>
    %c33 = arith.constant 33 : index
    %c0_35 = arith.constant 0 : index
    %51 = vector.load %arg9[%c33, %c0_35] : memref<64x256xf32, #tpu.memory_space<vmem>>, vector<1x256xf32>
    tpu.vector_store %arg9[%c33, %c0_35], %50 {strides = array<i32>} : memref<64x256xf32, #tpu.memory_space<vmem>>, vector<1x256xf32>,
    %c5 = arith.constant 5 : index
    %52 = memref.load %arg1[%c5] : memref<16xi32, #tpu.memory_space<smem>>
    %53 = arith.index_cast %52 : i32 to index
    %c0_36 = arith.constant 0 : index
    %c0_37 = arith.constant 0 : index
    %54 = vector.load %arg2[%53, %c0_36, %c0_37] : memref<50x1x256xf32, #tpu.memory_space<vmem>>, vector<1x1x256xf32>
    %55 = vector.shape_cast %54 : vector<1x1x256xf32> to vector<1x256xf32>
    %c40 = arith.constant 40 : index
    %c0_38 = arith.constant 0 : index
    %56 = vector.load %arg9[%c40, %c0_38] : memref<64x256xf32, #tpu.memory_space<vmem>>, vector<1x256xf32>
    tpu.vector_store %arg9[%c40, %c0_38], %55 {strides = array<i32>} : memref<64x256xf32, #tpu.memory_space<vmem>>, vector<1x256xf32>,
    %c13 = arith.constant 13 : index
    %57 = memref.load %arg1[%c13] : memref<16xi32, #tpu.memory_space<smem>>
    %58 = arith.index_cast %57 : i32 to index
    %c0_39 = arith.constant 0 : index
    %c0_40 = arith.constant 0 : index
    %59 = vector.load %arg2[%58, %c0_39, %c0_40] : memref<50x1x256xf32, #tpu.memory_space<vmem>>, vector<1x1x256xf32>
    %60 = vector.shape_cast %59 : vector<1x1x256xf32> to vector<1x256xf32>
    %c41 = arith.constant 41 : index
    %c0_41 = arith.constant 0 : index
    %61 = vector.load %arg9[%c41, %c0_41] : memref<64x256xf32, #tpu.memory_space<vmem>>, vector<1x256xf32>
    tpu.vector_store %arg9[%c41, %c0_41], %60 {strides = array<i32>} : memref<64x256xf32, #tpu.memory_space<vmem>>, vector<1x256xf32>,
    %c6 = arith.constant 6 : index
    %62 = memref.load %arg1[%c6] : memref<16xi32, #tpu.memory_space<smem>>
    %63 = arith.index_cast %62 : i32 to index
    %c0_42 = arith.constant 0 : index
    %c0_43 = arith.constant 0 : index
    %64 = vector.load %arg2[%63, %c0_42, %c0_43] : memref<50x1x256xf32, #tpu.memory_space<vmem>>, vector<1x1x256xf32>
    %65 = vector.shape_cast %64 : vector<1x1x256xf32> to vector<1x256xf32>
    %c48 = arith.constant 48 : index
    %c0_44 = arith.constant 0 : index
    %66 = vector.load %arg9[%c48, %c0_44] : memref<64x256xf32, #tpu.memory_space<vmem>>, vector<1x256xf32>
    tpu.vector_store %arg9[%c48, %c0_44], %65 {strides = array<i32>} : memref<64x256xf32, #tpu.memory_space<vmem>>, vector<1x256xf32>,
    %c14 = arith.constant 14 : index
    %67 = memref.load %arg1[%c14] : memref<16xi32, #tpu.memory_space<smem>>
    %68 = arith.index_cast %67 : i32 to index
    %c0_45 = arith.constant 0 : index
    %c0_46 = arith.constant 0 : index
    %69 = vector.load %arg2[%68, %c0_45, %c0_46] : memref<50x1x256xf32, #tpu.memory_space<vmem>>, vector<1x1x256xf32>
    %70 = vector.shape_cast %69 : vector<1x1x256xf32> to vector<1x256xf32>
    %c49 = arith.constant 49 : index
    %c0_47 = arith.constant 0 : index
    %71 = vector.load %arg9[%c49, %c0_47] : memref<64x256xf32, #tpu.memory_space<vmem>>, vector<1x256xf32>
    tpu.vector_store %arg9[%c49, %c0_47], %70 {strides = array<i32>} : memref<64x256xf32, #tpu.memory_space<vmem>>, vector<1x256xf32>,
    %c7 = arith.constant 7 : index
    %72 = memref.load %arg1[%c7] : memref<16xi32, #tpu.memory_space<smem>>
    %73 = arith.index_cast %72 : i32 to index
    %c0_48 = arith.constant 0 : index
    %c0_49 = arith.constant 0 : index
    %74 = vector.load %arg2[%73, %c0_48, %c0_49] : memref<50x1x256xf32, #tpu.memory_space<vmem>>, vector<1x1x256xf32>
    %75 = vector.shape_cast %74 : vector<1x1x256xf32> to vector<1x256xf32>
    %c56 = arith.constant 56 : index
    %c0_50 = arith.constant 0 : index
    %76 = vector.load %arg9[%c56, %c0_50] : memref<64x256xf32, #tpu.memory_space<vmem>>, vector<1x256xf32>
    tpu.vector_store %arg9[%c56, %c0_50], %75 {strides = array<i32>} : memref<64x256xf32, #tpu.memory_space<vmem>>, vector<1x256xf32>,
    %c15 = arith.constant 15 : index
    %77 = memref.load %arg1[%c15] : memref<16xi32, #tpu.memory_space<smem>>
    %78 = arith.index_cast %77 : i32 to index
    %c0_51 = arith.constant 0 : index
    %c0_52 = arith.constant 0 : index
    %79 = vector.load %arg2[%78, %c0_51, %c0_52] : memref<50x1x256xf32, #tpu.memory_space<vmem>>, vector<1x1x256xf32>
    %80 = vector.shape_cast %79 : vector<1x1x256xf32> to vector<1x256xf32>
    %c57 = arith.constant 57 : index
    %c0_53 = arith.constant 0 : index
    %81 = vector.load %arg9[%c57, %c0_53] : memref<64x256xf32, #tpu.memory_space<vmem>>, vector<1x256xf32>
    tpu.vector_store %arg9[%c57, %c0_53], %80 {strides = array<i32>} : memref<64x256xf32, #tpu.memory_space<vmem>>, vector<1x256xf32>,
    %c0_54 = arith.constant 0 : index
    %c0_55 = arith.constant 0 : index
    %82 = vector.load %arg9[%c0_54, %c0_55] : memref<64x256xf32, #tpu.memory_space<vmem>>, vector<64x256xf32>
    %c0_56 = arith.constant 0 : index
    %c0_57 = arith.constant 0 : index
    %83 = vector.load %arg3[%c0_56, %c0_57] : memref<256x128xf32, #tpu.memory_space<vmem>>, vector<256x128xf32>
    %cst_58 = arith.constant dense<0.000000e+00> : vector<64x128xf32>
    %84 = tpu.matmul %82, %83, %cst_58 {dimension_numbers = #tpu.dot_dimension_numbers<[1], [0], [0], [1], [0, 0, 1, 1], [], []>} : vector<64x256xf32>, vector<256x128xf32>, vector<64x128xf32> -> vector<64x128xf32>
    %c0_59 = arith.constant 0 : index
    %c0_60 = arith.constant 0 : index
    %85 = vector.load %arg5[%c0_59, %c0_60] : memref<1x128xf32, #tpu.memory_space<vmem>>, vector<1x128xf32>
    %86 = vector.broadcast %85 : vector<1x128xf32> to vector<64x128xf32>
    %87 = arith.addf %84, %86 : vector<64x128xf32>
    %c0_61 = arith.constant 0 : index
    %c0_62 = arith.constant 0 : index
    %88 = vector.load %arg4[%c0_61, %c0_62] : memref<32x128xf32, #tpu.memory_space<vmem>>, vector<32x128xf32>
    %89 = tpu.iota {dimensions = array<i32: 1>} : vector<8x128xi32>
    %c64_i32 = arith.constant 64 : i32
    %90 = vector.broadcast %c64_i32 : i32 to vector<8x128xi32>
    %91 = arith.cmpi sge, %89, %90 : vector<8x128xi32>
    %c96_i32 = arith.constant 96 : i32
    %92 = vector.broadcast %c96_i32 : i32 to vector<8x128xi32>
    %93 = arith.cmpi slt, %89, %92 : vector<8x128xi32>
    %94 = arith.andi %91, %93 : vector<8x128xi1>
    %cst_63 = arith.constant 0.000000e+00 : f32
    %95 = vector.broadcast %cst_63 : f32 to vector<8x32xf32>
    %cst_64 = arith.constant 0.000000e+00 : f32
    %96 = vector.broadcast %cst_64 : f32 to vector<8x32xf32>
    %97 = vector.extract_strided_slice %87 {offsets = [0, 0], sizes = [8, 128], strides = [1, 1]} : vector<64x128xf32> to vector<8x128xf32>
    %cst_65 = arith.constant dense<0.000000e+00> : vector<8x128xf32>
    %98 = tpu.matmul %95, %88, %cst_65 {dimension_numbers = #tpu.dot_dimension_numbers<[1], [0], [0], [1], [0, 0, 1, 1], [], []>} : vector<8x32xf32>, vector<32x128xf32>, vector<8x128xf32> -> vector<8x128xf32>
    %99 = arith.addf %97, %98 : vector<8x128xf32>
    %100 = arith.addf %99, %99 : vector<8x128xf32>
    %101 = arith.select %94, %100, %99 : vector<8x128xi1>, vector<8x128xf32>
    %102 = arith.negf %101 : vector<8x128xf32>
    %103 = math.exp %102 : vector<8x128xf32>
    %cst_66 = arith.constant 1.000000e+00 : f32
    %104 = vector.broadcast %cst_66 : f32 to vector<8x128xf32>
    %105 = arith.addf %104, %103 : vector<8x128xf32>
    %106 = arith.divf %104, %105 : vector<8x128xf32>
    %107 = arith.addf %106, %106 : vector<8x128xf32>
    %cst_67 = arith.constant 1.000000e+00 : f32
    %108 = vector.broadcast %cst_67 : f32 to vector<8x128xf32>
    %109 = arith.subf %107, %108 : vector<8x128xf32>
    %110 = arith.select %94, %109, %106 : vector<8x128xi1>, vector<8x128xf32>
    %111 = vector.extract_strided_slice %110 {offsets = [0, 0], sizes = [8, 32], strides = [1, 1]} : vector<8x128xf32> to vector<8x32xf32>
    %112 = vector.extract_strided_slice %110 {offsets = [0, 32], sizes = [8, 32], strides = [1, 1]} : vector<8x128xf32> to vector<8x32xf32>
    %113 = vector.extract_strided_slice %110 {offsets = [0, 64], sizes = [8, 32], strides = [1, 1]} : vector<8x128xf32> to vector<8x32xf32>
    %114 = vector.extract_strided_slice %110 {offsets = [0, 96], sizes = [8, 32], strides = [1, 1]} : vector<8x128xf32> to vector<8x32xf32>
    %115 = arith.mulf %112, %96 : vector<8x32xf32>
    %116 = arith.mulf %111, %113 : vector<8x32xf32>
    %117 = arith.addf %115, %116 : vector<8x32xf32>
    %118 = math.tanh %117 : vector<8x32xf32>
    %119 = arith.mulf %114, %118 : vector<8x32xf32>
    %120 = vector.extract_strided_slice %87 {offsets = [8, 0], sizes = [8, 128], strides = [1, 1]} : vector<64x128xf32> to vector<8x128xf32>
    %cst_68 = arith.constant dense<0.000000e+00> : vector<8x128xf32>
    %121 = tpu.matmul %119, %88, %cst_68 {dimension_numbers = #tpu.dot_dimension_numbers<[1], [0], [0], [1], [0, 0, 1, 1], [], []>} : vector<8x32xf32>, vector<32x128xf32>, vector<8x128xf32> -> vector<8x128xf32>
    %122 = arith.addf %120, %121 : vector<8x128xf32>
    %123 = arith.addf %122, %122 : vector<8x128xf32>
    %124 = arith.select %94, %123, %122 : vector<8x128xi1>, vector<8x128xf32>
    %125 = arith.negf %124 : vector<8x128xf32>
    %126 = math.exp %125 : vector<8x128xf32>
    %cst_69 = arith.constant 1.000000e+00 : f32
    %127 = vector.broadcast %cst_69 : f32 to vector<8x128xf32>
    %128 = arith.addf %127, %126 : vector<8x128xf32>
    %129 = arith.divf %127, %128 : vector<8x128xf32>
    %130 = arith.addf %129, %129 : vector<8x128xf32>
    %cst_70 = arith.constant 1.000000e+00 : f32
    %131 = vector.broadcast %cst_70 : f32 to vector<8x128xf32>
    %132 = arith.subf %130, %131 : vector<8x128xf32>
    %133 = arith.select %94, %132, %129 : vector<8x128xi1>, vector<8x128xf32>
    %134 = vector.extract_strided_slice %133 {offsets = [0, 0], sizes = [8, 32], strides = [1, 1]} : vector<8x128xf32> to vector<8x32xf32>
    %135 = vector.extract_strided_slice %133 {offsets = [0, 32], sizes = [8, 32], strides = [1, 1]} : vector<8x128xf32> to vector<8x32xf32>
    %136 = vector.extract_strided_slice %133 {offsets = [0, 64], sizes = [8, 32], strides = [1, 1]} : vector<8x128xf32> to vector<8x32xf32>
    %137 = vector.extract_strided_slice %133 {offsets = [0, 96], sizes = [8, 32], strides = [1, 1]} : vector<8x128xf32> to vector<8x32xf32>
    %138 = arith.mulf %135, %117 : vector<8x32xf32>
    %139 = arith.mulf %134, %136 : vector<8x32xf32>
    %140 = arith.addf %138, %139 : vector<8x32xf32>
    %141 = math.tanh %140 : vector<8x32xf32>
    %142 = arith.mulf %137, %141 : vector<8x32xf32>
    %143 = vector.extract_strided_slice %87 {offsets = [16, 0], sizes = [8, 128], strides = [1, 1]} : vector<64x128xf32> to vector<8x128xf32>
    %cst_71 = arith.constant dense<0.000000e+00> : vector<8x128xf32>
    %144 = tpu.matmul %142, %88, %cst_71 {dimension_numbers = #tpu.dot_dimension_numbers<[1], [0], [0], [1], [0, 0, 1, 1], [], []>} : vector<8x32xf32>, vector<32x128xf32>, vector<8x128xf32> -> vector<8x128xf32>
    %145 = arith.addf %143, %144 : vector<8x128xf32>
    %146 = arith.addf %145, %145 : vector<8x128xf32>
    %147 = arith.select %94, %146, %145 : vector<8x128xi1>, vector<8x128xf32>
    %148 = arith.negf %147 : vector<8x128xf32>
    %149 = math.exp %148 : vector<8x128xf32>
    %cst_72 = arith.constant 1.000000e+00 : f32
    %150 = vector.broadcast %cst_72 : f32 to vector<8x128xf32>
    %151 = arith.addf %150, %149 : vector<8x128xf32>
    %152 = arith.divf %150, %151 : vector<8x128xf32>
    %153 = arith.addf %152, %152 : vector<8x128xf32>
    %cst_73 = arith.constant 1.000000e+00 : f32
    %154 = vector.broadcast %cst_73 : f32 to vector<8x128xf32>
    %155 = arith.subf %153, %154 : vector<8x128xf32>
    %156 = arith.select %94, %155, %152 : vector<8x128xi1>, vector<8x128xf32>
    %157 = vector.extract_strided_slice %156 {offsets = [0, 0], sizes = [8, 32], strides = [1, 1]} : vector<8x128xf32> to vector<8x32xf32>
    %158 = vector.extract_strided_slice %156 {offsets = [0, 32], sizes = [8, 32], strides = [1, 1]} : vector<8x128xf32> to vector<8x32xf32>
    %159 = vector.extract_strided_slice %156 {offsets = [0, 64], sizes = [8, 32], strides = [1, 1]} : vector<8x128xf32> to vector<8x32xf32>
    %160 = vector.extract_strided_slice %156 {offsets = [0, 96], sizes = [8, 32], strides = [1, 1]} : vector<8x128xf32> to vector<8x32xf32>
    %161 = arith.mulf %158, %140 : vector<8x32xf32>
    %162 = arith.mulf %157, %159 : vector<8x32xf32>
    %163 = arith.addf %161, %162 : vector<8x32xf32>
    %164 = math.tanh %163 : vector<8x32xf32>
    %165 = arith.mulf %160, %164 : vector<8x32xf32>
    %166 = vector.extract_strided_slice %87 {offsets = [24, 0], sizes = [8, 128], strides = [1, 1]} : vector<64x128xf32> to vector<8x128xf32>
    %cst_74 = arith.constant dense<0.000000e+00> : vector<8x128xf32>
    %167 = tpu.matmul %165, %88, %cst_74 {dimension_numbers = #tpu.dot_dimension_numbers<[1], [0], [0], [1], [0, 0, 1, 1], [], []>} : vector<8x32xf32>, vector<32x128xf32>, vector<8x128xf32> -> vector<8x128xf32>
    %168 = arith.addf %166, %167 : vector<8x128xf32>
    %169 = arith.addf %168, %168 : vector<8x128xf32>
    %170 = arith.select %94, %169, %168 : vector<8x128xi1>, vector<8x128xf32>
    %171 = arith.negf %170 : vector<8x128xf32>
    %172 = math.exp %171 : vector<8x128xf32>
    %cst_75 = arith.constant 1.000000e+00 : f32
    %173 = vector.broadcast %cst_75 : f32 to vector<8x128xf32>
    %174 = arith.addf %173, %172 : vector<8x128xf32>
    %175 = arith.divf %173, %174 : vector<8x128xf32>
    %176 = arith.addf %175, %175 : vector<8x128xf32>
    %cst_76 = arith.constant 1.000000e+00 : f32
    %177 = vector.broadcast %cst_76 : f32 to vector<8x128xf32>
    %178 = arith.subf %176, %177 : vector<8x128xf32>
    %179 = arith.select %94, %178, %175 : vector<8x128xi1>, vector<8x128xf32>
    %180 = vector.extract_strided_slice %179 {offsets = [0, 0], sizes = [8, 32], strides = [1, 1]} : vector<8x128xf32> to vector<8x32xf32>
    %181 = vector.extract_strided_slice %179 {offsets = [0, 32], sizes = [8, 32], strides = [1, 1]} : vector<8x128xf32> to vector<8x32xf32>
    %182 = vector.extract_strided_slice %179 {offsets = [0, 64], sizes = [8, 32], strides = [1, 1]} : vector<8x128xf32> to vector<8x32xf32>
    %183 = vector.extract_strided_slice %179 {offsets = [0, 96], sizes = [8, 32], strides = [1, 1]} : vector<8x128xf32> to vector<8x32xf32>
    %184 = arith.mulf %181, %163 : vector<8x32xf32>
    %185 = arith.mulf %180, %182 : vector<8x32xf32>
    %186 = arith.addf %184, %185 : vector<8x32xf32>
    %187 = math.tanh %186 : vector<8x32xf32>
    %188 = arith.mulf %183, %187 : vector<8x32xf32>
    %189 = vector.extract_strided_slice %87 {offsets = [32, 0], sizes = [8, 128], strides = [1, 1]} : vector<64x128xf32> to vector<8x128xf32>
    %cst_77 = arith.constant dense<0.000000e+00> : vector<8x128xf32>
    %190 = tpu.matmul %188, %88, %cst_77 {dimension_numbers = #tpu.dot_dimension_numbers<[1], [0], [0], [1], [0, 0, 1, 1], [], []>} : vector<8x32xf32>, vector<32x128xf32>, vector<8x128xf32> -> vector<8x128xf32>
    %191 = arith.addf %189, %190 : vector<8x128xf32>
    %192 = arith.addf %191, %191 : vector<8x128xf32>
    %193 = arith.select %94, %192, %191 : vector<8x128xi1>, vector<8x128xf32>
    %194 = arith.negf %193 : vector<8x128xf32>
    %195 = math.exp %194 : vector<8x128xf32>
    %cst_78 = arith.constant 1.000000e+00 : f32
    %196 = vector.broadcast %cst_78 : f32 to vector<8x128xf32>
    %197 = arith.addf %196, %195 : vector<8x128xf32>
    %198 = arith.divf %196, %197 : vector<8x128xf32>
    %199 = arith.addf %198, %198 : vector<8x128xf32>
    %cst_79 = arith.constant 1.000000e+00 : f32
    %200 = vector.broadcast %cst_79 : f32 to vector<8x128xf32>
    %201 = arith.subf %199, %200 : vector<8x128xf32>
    %202 = arith.select %94, %201, %198 : vector<8x128xi1>, vector<8x128xf32>
    %203 = vector.extract_strided_slice %202 {offsets = [0, 0], sizes = [8, 32], strides = [1, 1]} : vector<8x128xf32> to vector<8x32xf32>
    %204 = vector.extract_strided_slice %202 {offsets = [0, 32], sizes = [8, 32], strides = [1, 1]} : vector<8x128xf32> to vector<8x32xf32>
    %205 = vector.extract_strided_slice %202 {offsets = [0, 64], sizes = [8, 32], strides = [1, 1]} : vector<8x128xf32> to vector<8x32xf32>
    %206 = vector.extract_strided_slice %202 {offsets = [0, 96], sizes = [8, 32], strides = [1, 1]} : vector<8x128xf32> to vector<8x32xf32>
    %207 = arith.mulf %204, %186 : vector<8x32xf32>
    %208 = arith.mulf %203, %205 : vector<8x32xf32>
    %209 = arith.addf %207, %208 : vector<8x32xf32>
    %210 = math.tanh %209 : vector<8x32xf32>
    %211 = arith.mulf %206, %210 : vector<8x32xf32>
    %212 = vector.extract_strided_slice %87 {offsets = [40, 0], sizes = [8, 128], strides = [1, 1]} : vector<64x128xf32> to vector<8x128xf32>
    %cst_80 = arith.constant dense<0.000000e+00> : vector<8x128xf32>
    %213 = tpu.matmul %211, %88, %cst_80 {dimension_numbers = #tpu.dot_dimension_numbers<[1], [0], [0], [1], [0, 0, 1, 1], [], []>} : vector<8x32xf32>, vector<32x128xf32>, vector<8x128xf32> -> vector<8x128xf32>
    %214 = arith.addf %212, %213 : vector<8x128xf32>
    %215 = arith.addf %214, %214 : vector<8x128xf32>
    %216 = arith.select %94, %215, %214 : vector<8x128xi1>, vector<8x128xf32>
    %217 = arith.negf %216 : vector<8x128xf32>
    %218 = math.exp %217 : vector<8x128xf32>
    %cst_81 = arith.constant 1.000000e+00 : f32
    %219 = vector.broadcast %cst_81 : f32 to vector<8x128xf32>
    %220 = arith.addf %219, %218 : vector<8x128xf32>
    %221 = arith.divf %219, %220 : vector<8x128xf32>
    %222 = arith.addf %221, %221 : vector<8x128xf32>
    %cst_82 = arith.constant 1.000000e+00 : f32
    %223 = vector.broadcast %cst_82 : f32 to vector<8x128xf32>
    %224 = arith.subf %222, %223 : vector<8x128xf32>
    %225 = arith.select %94, %224, %221 : vector<8x128xi1>, vector<8x128xf32>
    %226 = vector.extract_strided_slice %225 {offsets = [0, 0], sizes = [8, 32], strides = [1, 1]} : vector<8x128xf32> to vector<8x32xf32>
    %227 = vector.extract_strided_slice %225 {offsets = [0, 32], sizes = [8, 32], strides = [1, 1]} : vector<8x128xf32> to vector<8x32xf32>
    %228 = vector.extract_strided_slice %225 {offsets = [0, 64], sizes = [8, 32], strides = [1, 1]} : vector<8x128xf32> to vector<8x32xf32>
    %229 = vector.extract_strided_slice %225 {offsets = [0, 96], sizes = [8, 32], strides = [1, 1]} : vector<8x128xf32> to vector<8x32xf32>
    %230 = arith.mulf %227, %209 : vector<8x32xf32>
    %231 = arith.mulf %226, %228 : vector<8x32xf32>
    %232 = arith.addf %230, %231 : vector<8x32xf32>
    %233 = math.tanh %232 : vector<8x32xf32>
    %234 = arith.mulf %229, %233 : vector<8x32xf32>
    %235 = vector.extract_strided_slice %87 {offsets = [48, 0], sizes = [8, 128], strides = [1, 1]} : vector<64x128xf32> to vector<8x128xf32>
    %cst_83 = arith.constant dense<0.000000e+00> : vector<8x128xf32>
    %236 = tpu.matmul %234, %88, %cst_83 {dimension_numbers = #tpu.dot_dimension_numbers<[1], [0], [0], [1], [0, 0, 1, 1], [], []>} : vector<8x32xf32>, vector<32x128xf32>, vector<8x128xf32> -> vector<8x128xf32>
    %237 = arith.addf %235, %236 : vector<8x128xf32>
    %238 = arith.addf %237, %237 : vector<8x128xf32>
    %239 = arith.select %94, %238, %237 : vector<8x128xi1>, vector<8x128xf32>
    %240 = arith.negf %239 : vector<8x128xf32>
    %241 = math.exp %240 : vector<8x128xf32>
    %cst_84 = arith.constant 1.000000e+00 : f32
    %242 = vector.broadcast %cst_84 : f32 to vector<8x128xf32>
    %243 = arith.addf %242, %241 : vector<8x128xf32>
    %244 = arith.divf %242, %243 : vector<8x128xf32>
    %245 = arith.addf %244, %244 : vector<8x128xf32>
    %cst_85 = arith.constant 1.000000e+00 : f32
    %246 = vector.broadcast %cst_85 : f32 to vector<8x128xf32>
    %247 = arith.subf %245, %246 : vector<8x128xf32>
    %248 = arith.select %94, %247, %244 : vector<8x128xi1>, vector<8x128xf32>
    %249 = vector.extract_strided_slice %248 {offsets = [0, 0], sizes = [8, 32], strides = [1, 1]} : vector<8x128xf32> to vector<8x32xf32>
    %250 = vector.extract_strided_slice %248 {offsets = [0, 32], sizes = [8, 32], strides = [1, 1]} : vector<8x128xf32> to vector<8x32xf32>
    %251 = vector.extract_strided_slice %248 {offsets = [0, 64], sizes = [8, 32], strides = [1, 1]} : vector<8x128xf32> to vector<8x32xf32>
    %252 = vector.extract_strided_slice %248 {offsets = [0, 96], sizes = [8, 32], strides = [1, 1]} : vector<8x128xf32> to vector<8x32xf32>
    %253 = arith.mulf %250, %232 : vector<8x32xf32>
    %254 = arith.mulf %249, %251 : vector<8x32xf32>
    %255 = arith.addf %253, %254 : vector<8x32xf32>
    %256 = math.tanh %255 : vector<8x32xf32>
    %257 = arith.mulf %252, %256 : vector<8x32xf32>
    %258 = vector.extract_strided_slice %87 {offsets = [56, 0], sizes = [8, 128], strides = [1, 1]} : vector<64x128xf32> to vector<8x128xf32>
    %cst_86 = arith.constant dense<0.000000e+00> : vector<8x128xf32>
    %259 = tpu.matmul %257, %88, %cst_86 {dimension_numbers = #tpu.dot_dimension_numbers<[1], [0], [0], [1], [0, 0, 1, 1], [], []>} : vector<8x32xf32>, vector<32x128xf32>, vector<8x128xf32> -> vector<8x128xf32>
    %260 = arith.addf %258, %259 : vector<8x128xf32>
    %261 = arith.addf %260, %260 : vector<8x128xf32>
    %262 = arith.select %94, %261, %260 : vector<8x128xi1>, vector<8x128xf32>
    %263 = arith.negf %262 : vector<8x128xf32>
    %264 = math.exp %263 : vector<8x128xf32>
    %cst_87 = arith.constant 1.000000e+00 : f32
    %265 = vector.broadcast %cst_87 : f32 to vector<8x128xf32>
    %266 = arith.addf %265, %264 : vector<8x128xf32>
    %267 = arith.divf %265, %266 : vector<8x128xf32>
    %268 = arith.addf %267, %267 : vector<8x128xf32>
    %cst_88 = arith.constant 1.000000e+00 : f32
    %269 = vector.broadcast %cst_88 : f32 to vector<8x128xf32>
    %270 = arith.subf %268, %269 : vector<8x128xf32>
    %271 = arith.select %94, %270, %267 : vector<8x128xi1>, vector<8x128xf32>
    %272 = vector.extract_strided_slice %271 {offsets = [0, 0], sizes = [8, 32], strides = [1, 1]} : vector<8x128xf32> to vector<8x32xf32>
    %273 = vector.extract_strided_slice %271 {offsets = [0, 32], sizes = [8, 32], strides = [1, 1]} : vector<8x128xf32> to vector<8x32xf32>
    %274 = vector.extract_strided_slice %271 {offsets = [0, 64], sizes = [8, 32], strides = [1, 1]} : vector<8x128xf32> to vector<8x32xf32>
    %275 = vector.extract_strided_slice %271 {offsets = [0, 96], sizes = [8, 32], strides = [1, 1]} : vector<8x128xf32> to vector<8x32xf32>
    %276 = arith.mulf %273, %255 : vector<8x32xf32>
    %277 = arith.mulf %272, %274 : vector<8x32xf32>
    %278 = arith.addf %276, %277 : vector<8x32xf32>
    %279 = math.tanh %278 : vector<8x32xf32>
    %280 = arith.mulf %275, %279 : vector<8x32xf32>
    %c0_89 = arith.constant 0 : index
    %c0_90 = arith.constant 0 : index
    %281 = vector.load %arg6[%c0_89, %c0_90] : memref<32x128xf32, #tpu.memory_space<vmem>>, vector<32x128xf32>
    %cst_91 = arith.constant dense<0.000000e+00> : vector<8x128xf32>
    %282 = tpu.matmul %280, %281, %cst_91 {dimension_numbers = #tpu.dot_dimension_numbers<[1], [0], [0], [1], [0, 0, 1, 1], [], []>} : vector<8x32xf32>, vector<32x128xf32>, vector<8x128xf32> -> vector<8x128xf32>
    %c0_92 = arith.constant 0 : index
    %c0_93 = arith.constant 0 : index
    %283 = vector.load %arg7[%c0_92, %c0_93] : memref<1x128xf32, #tpu.memory_space<vmem>>, vector<1x128xf32>
    %284 = vector.broadcast %283 : vector<1x128xf32> to vector<8x128xf32>
    %285 = arith.addf %282, %284 : vector<8x128xf32>
    %c0_94 = arith.constant 0 : index
    %c0_95 = arith.constant 0 : index
    %286 = vector.load %arg8[%c0_94, %c0_95] : memref<8x128xf32, #tpu.memory_space<vmem>>, vector<8x128xf32>
    tpu.vector_store %arg8[%c0_94, %c0_95], %285 {strides = array<i32>} : memref<8x128xf32, #tpu.memory_space<vmem>>, vector<8x128xf32>,
    return
  }
  func.func @transform_0(%arg0: i32, %arg1: memref<16xi32, #tpu.memory_space<smem>>) -> (i32, i32, i32) {
    %c0_i32 = arith.constant 0 : i32
    %c0_i32_0 = arith.constant 0 : i32
    %c0_i32_1 = arith.constant 0 : i32
    %c0_i32_2 = arith.constant 0 : i32
    return %c0_i32, %c0_i32_0, %c0_i32_1 : i32, i32, i32
  }
  func.func @transform_1(%arg0: i32, %arg1: memref<16xi32, #tpu.memory_space<smem>>) -> (i32, i32) {
    %c0_i32 = arith.constant 0 : i32
    %c0_i32_0 = arith.constant 0 : i32
    %c0_i32_1 = arith.constant 0 : i32
    return %c0_i32, %c0_i32_0 : i32, i32
  }
  func.func @transform_2(%arg0: i32, %arg1: memref<16xi32, #tpu.memory_space<smem>>) -> (i32, i32) {
    %c0_i32 = arith.constant 0 : i32
    %c0_i32_0 = arith.constant 0 : i32
    %c0_i32_1 = arith.constant 0 : i32
    return %c0_i32, %c0_i32_0 : i32, i32
  }
  func.func @transform_3(%arg0: i32, %arg1: memref<16xi32, #tpu.memory_space<smem>>) -> (i32, i32) {
    %c0_i32 = arith.constant 0 : i32
    %c0_i32_0 = arith.constant 0 : i32
    %c0_i32_1 = arith.constant 0 : i32
    return %c0_i32, %c0_i32_0 : i32, i32
  }
  func.func @transform_4(%arg0: i32, %arg1: memref<16xi32, #tpu.memory_space<smem>>) -> (i32, i32) {
    %c0_i32 = arith.constant 0 : i32
    %c0_i32_0 = arith.constant 0 : i32
    %c0_i32_1 = arith.constant 0 : i32
    return %c0_i32, %c0_i32_0 : i32, i32
  }
  func.func @transform_5(%arg0: i32, %arg1: memref<16xi32, #tpu.memory_space<smem>>) -> (i32, i32) {
    %c0_i32 = arith.constant 0 : i32
    %c0_i32_0 = arith.constant 0 : i32
    %c0_i32_1 = arith.constant 0 : i32
    return %c0_i32, %c0_i32_0 : i32, i32
  }
  func.func @transform_6(%arg0: i32, %arg1: memref<16xi32, #tpu.memory_space<smem>>) -> (i32, i32) {
    %c0_i32 = arith.constant 0 : i32
    %c0_i32_0 = arith.constant 0 : i32
    %c0_i32_1 = arith.constant 0 : i32
    return %c0_i32, %c0_i32_0 : i32, i32
  }
}

</mosaic_0001>

<llo_original>
// kernel: tpu_custom_call.1
$region0: #{tpu_custom_call.1}
  #allocation0 [shape = 'u32[]', space=smem, size = 0x4, offset = 0x4, fixed_abs, tag = 'smem constant byte address 0x4 - core index']
  #allocation1 [shape = 'u32[144,128]{1,0:T(1,128)}', space=vmem, size = 0x12000, scoped, tag = 'internal scratch']
  #allocation2 [shape = 'f32[64,256]{1,0:T(8,128)}', space=vmem, size = 0x10000, scoped, tag = 'scratch operand']
  #allocation3 [shape = 's32[1]{0}', space=sflag, size = 0x4, scoped, tag = 'scoped memory for tpu_custom_call.1']
  #allocation4 [shape = 'u8[512]{0}', space=smem, size = 0x200, scoped, tag = 'prefetched SMEM operand 0']
  %s0 = inlined_call_operand.hbm [shape: s32[16], index: 0, kind: input, shape index: {}]
  %s1 = inlined_call_operand.hbm [shape: f32[50,1,256], index: 1, kind: input, shape index: {}]
  %s2 = inlined_call_operand.hbm [shape: f32[256,128], index: 2, kind: input, shape index: {}]
  %s3 = inlined_call_operand.hbm [shape: f32[32,128], index: 3, kind: input, shape index: {}]
  %s4 = inlined_call_operand.vmem [shape: f32[1,128], index: 4, kind: input, shape index: {}]
  %s5 = inlined_call_operand.hbm [shape: f32[32,128], index: 5, kind: input, shape index: {}]
  %s6 = inlined_call_operand.vmem [shape: f32[1,128], index: 6, kind: input, shape index: {}]
  %s7 = inlined_call_operand.hbm [shape: f32[8,128], index: 7, kind: output, shape index: {}]
  %s8 = sld [smem:[#allocation0]]
  $region50: #{tpu_custom_call.1} parent=0
    _
  %s10 = ssub.s32 1, %s8
  %s11 = scalar_select 0, %s10, %s8
  %13 = dma.hbm_to_smem %s0, 16, [#allocation4], [#allocation3]
  %14 = dma.done [#allocation3], 16
  %15 = sfence
  $region1: #{tpu_custom_call.1} parent=0
    #allocation5 [shape = 'u8[51200]{0}', space=vmem, size = 0xc800, scoped, tag = 'input window, operand 1, single buffered']
    #allocation6 [shape = 's32[1]{0}', space=sflag, size = 0x4, scoped, tag = 'scoped memory for tpu_custom_call.1']
    #allocation7 [shape = 's32[1]{0}', space=sflag, size = 0x4, scoped, tag = 'scoped memory for tpu_custom_call.1']
    #allocation8 [shape = 'u8[131072]{0}', space=vmem, size = 0x20000, scoped, tag = 'input window, operand 2, single buffered']
    #allocation9 [shape = 's32[1]{0}', space=sflag, size = 0x4, scoped, tag = 'scoped memory for tpu_custom_call.1']
    #allocation10 [shape = 'u8[16384]{0}', space=vmem, size = 0x4000, scoped, tag = 'input window, operand 3, single buffered']
    #allocation11 [shape = 'u8[16384]{0}', space=vmem, size = 0x4000, scoped, tag = 'input window, operand 5, single buffered']
    #allocation12 [shape = 's32[1]{0}', space=sflag, size = 0x4, scoped, tag = 'scoped memory for tpu_custom_call.1']
    #allocation13 [shape = 'u8[4096]{0}', space=vmem, size = 0x1000, scoped, tag = 'output window, operand 0, single buffered']
    %16 = vsyncpa [#allocation6], 0
    %17 = vsyncpa [#allocation9], 0
    %18 = vsyncpa [#allocation12], 0
    %19 = vsyncpa [#allocation7], 0
    // Predicated region
    $region2: #{tpu_custom_call.1} parent=1 // pred_check
      _
    $region3: #{tpu_custom_call.1} parent=1 // pred_check_branch
      %21 = sbr.rel (0) target = $region5
    $region4: #{tpu_custom_call.1} parent=1 // pred_region
      %s23 = ssub.s32 1600, 1600
      %24 = vsyncadd [#allocation6], %s23
      %s25 = sshll.u32 [#allocation5], 4
      %s26 = int_to_ptr.vmem [resolvable:$true] %s25
      %31 = dma.hbm_to_vmem [thread:$0]  %s1, 1600, %s26, [#allocation6], 32, 32, 2
    $region5: #{tpu_custom_call.1} parent=1 // pred_fallthru
      _
    // Predicated region
    $region6: #{tpu_custom_call.1} parent=1 // pred_check
      _
    $region7: #{tpu_custom_call.1} parent=1 // pred_check_branch
      %33 = sbr.rel (0) target = $region9
    $region8: #{tpu_custom_call.1} parent=1 // pred_region
      %s35 = ssub.s32 4096, 4096
      %36 = vsyncadd [#allocation9], %s35
      %s37 = sshll.u32 [#allocation8], 4
      %s38 = int_to_ptr.vmem [resolvable:$true] %s37
      %43 = dma.hbm_to_vmem [thread:$0]  %s2, 4096, %s38, [#allocation9], 128, 128, 8
    $region9: #{tpu_custom_call.1} parent=1 // pred_fallthru
      _
    // Predicated region
    $region10: #{tpu_custom_call.1} parent=1 // pred_check
      _
    $region11: #{tpu_custom_call.1} parent=1 // pred_check_branch
      %45 = sbr.rel (0) target = $region13
    $region12: #{tpu_custom_call.1} parent=1 // pred_region
      %s47 = ssub.s32 512, 512
      %48 = vsyncadd [#allocation9], %s47
      %s49 = sshll.u32 [#allocation10], 4
      %s50 = int_to_ptr.vmem [resolvable:$true] %s49
      %55 = dma.hbm_to_vmem [thread:$0]  %s3, 512, %s50, [#allocation9], 128, 128, 8
    $region13: #{tpu_custom_call.1} parent=1 // pred_fallthru
      _
    // Predicated region
    $region14: #{tpu_custom_call.1} parent=1 // pred_check
      _
    $region15: #{tpu_custom_call.1} parent=1 // pred_check_branch
      %57 = sbr.rel (0) target = $region17
    $region16: #{tpu_custom_call.1} parent=1 // pred_region
      _
    $region17: #{tpu_custom_call.1} parent=1 // pred_fallthru
      _
    // Predicated region
    $region18: #{tpu_custom_call.1} parent=1 // pred_check
      _
    $region19: #{tpu_custom_call.1} parent=1 // pred_check_branch
      %59 = sbr.rel (0) target = $region21
    $region20: #{tpu_custom_call.1} parent=1 // pred_region
      %s61 = ssub.s32 512, 512
      %62 = vsyncadd [#allocation12], %s61
      %s63 = sshll.u32 [#allocation11], 4
      %s64 = int_to_ptr.vmem [resolvable:$true] %s63
      %69 = dma.hbm_to_vmem [thread:$0]  %s5, 512, %s64, [#allocation12], 128, 128, 8
    $region21: #{tpu_custom_call.1} parent=1 // pred_fallthru
      _
    // Predicated region
    $region22: #{tpu_custom_call.1} parent=1 // pred_check
      _
    $region23: #{tpu_custom_call.1} parent=1 // pred_check_branch
      %71 = sbr.rel (0) target = $region25
    $region24: #{tpu_custom_call.1} parent=1 // pred_region
      _
    $region25: #{tpu_custom_call.1} parent=1 // pred_fallthru
      _
    // Predicated region
    $region26: #{tpu_custom_call.1} parent=1 // pred_check
      _
    $region27: #{tpu_custom_call.1} parent=1 // pred_check_branch
      %73 = sbr.rel (0) target = $region29
    $region28: #{tpu_custom_call.1} parent=1 // pred_region
      %74 = dma.done [#allocation6], 1600
    $region29: #{tpu_custom_call.1} parent=1 // pred_fallthru
      _
    // Predicated region
    $region30: #{tpu_custom_call.1} parent=1 // pred_check
      _
    $region31: #{tpu_custom_call.1} parent=1 // pred_check_branch
      %76 = sbr.rel (0) target = $region33
    $region32: #{tpu_custom_call.1} parent=1 // pred_region
      %77 = dma.done [#allocation9], 4096
    $region33: #{tpu_custom_call.1} parent=1 // pred_fallthru
      _
    // Predicated region
    $region34: #{tpu_custom_call.1} parent=1 // pred_check
      _
    $region35: #{tpu_custom_call.1} parent=1 // pred_check_branch
      %79 = sbr.rel (0) target = $region37
    $region36: #{tpu_custom_call.1} parent=1 // pred_region
      %80 = dma.done [#allocation9], 512
    $region37: #{tpu_custom_call.1} parent=1 // pred_fallthru
      _
    // Predicated region
    $region38: #{tpu_custom_call.1} parent=1 // pred_check
      _
    $region39: #{tpu_custom_call.1} parent=1 // pred_check_branch
      %82 = sbr.rel (0) target = $region41
    $region40: #{tpu_custom_call.1} parent=1 // pred_region
      %83 = dma.done [#allocation12], 512
    $region41: #{tpu_custom_call.1} parent=1 // pred_fallthru
      _
    %84 = vst [vmem:[#allocation2] sm:$0xff] 0.0
    %85 = vst [vmem:[#allocation2 + $0x8] sm:$0xff] 0.0
    %86 = vst [vmem:[#allocation2 + $0x10] sm:$0xff] 0.0
    %87 = vst [vmem:[#allocation2 + $0x18] sm:$0xff] 0.0
    %88 = vst [vmem:[#allocation2 + $0x20] sm:$0xff] 0.0
    %89 = vst [vmem:[#allocation2 + $0x28] sm:$0xff] 0.0
    %90 = vst [vmem:[#allocation2 + $0x30] sm:$0xff] 0.0
    %91 = vst [vmem:[#allocation2 + $0x38] sm:$0xff] 0.0
    %92 = vst [vmem:[#allocation2 + $0x40] sm:$0xff] 0.0
    %93 = vst [vmem:[#allocation2 + $0x48] sm:$0xff] 0.0
    %94 = vst [vmem:[#allocation2 + $0x50] sm:$0xff] 0.0
    %95 = vst [vmem:[#allocation2 + $0x58] sm:$0xff] 0.0
    %96 = vst [vmem:[#allocation2 + $0x60] sm:$0xff] 0.0
    %97 = vst [vmem:[#allocation2 + $0x68] sm:$0xff] 0.0
    %98 = vst [vmem:[#allocation2 + $0x70] sm:$0xff] 0.0
    %99 = vst [vmem:[#allocation2 + $0x78] sm:$0xff] 0.0
    %s100 = sld [smem:[#allocation4]]
    %s101 = smul.u32 %s100, 2
    %s102 = scalar_lea.vmem [#allocation5], %s101
    %v103 = vld [vmem:[%s102] sm:$0x3]
    %v104 = vlaneseq
    %vm105 = vcmp.ge.s32.totalorder %v104, 0
    %vm106 = vcmp.lt.s32.totalorder %v104, 256
    %vm107 = vmand %vm105, %vm106
    %108 = vst.msk [vmem:[#allocation2] ss:$8 sm:$0x3] %vm107, %v103
    %109 = vst.msk [vmem:[#allocation2] ss:$8 sm:$0x0] %vm107, %v103
    %s110 = sld [smem:[#allocation4 + $0x8]]
    %s111 = smul.u32 %s110, 2
    %s112 = scalar_lea.vmem [#allocation5], %s111
    %v113 = vld [vmem:[%s112] sm:$0x3]
    %s114 = scalar_lea.vmem [#allocation2], 1
    %115 = vst.msk [vmem:[%s114] ss:$8 sm:$0x3] %vm107, %v113
    %116 = vst.msk [vmem:[%s114] ss:$8 sm:$0x0] %vm107, %v113
    %s117 = sld [smem:[#allocation4 + $0x1]]
    %s118 = smul.u32 %s117, 2
    %s119 = scalar_lea.vmem [#allocation5], %s118
    %v120 = vld [vmem:[%s119] sm:$0x3]
    %s121 = scalar_lea.vmem [#allocation2], 16
    %122 = vst.msk [vmem:[%s121] ss:$8 sm:$0x3] %vm107, %v120
    %123 = vst.msk [vmem:[%s121] ss:$8 sm:$0x0] %vm107, %v120
    %s124 = sld [smem:[#allocation4 + $0x9]]
    %s125 = smul.u32 %s124, 2
    %s126 = scalar_lea.vmem [#allocation5], %s125
    %v127 = vld [vmem:[%s126] sm:$0x3]
    %s128 = scalar_lea.vmem [#allocation2], 17
    %129 = vst.msk [vmem:[%s128] ss:$8 sm:$0x3] %vm107, %v127
    %130 = vst.msk [vmem:[%s128] ss:$8 sm:$0x0] %vm107, %v127
    %s131 = sld [smem:[#allocation4 + $0x2]]
    %s132 = smul.u32 %s131, 2
    %s133 = scalar_lea.vmem [#allocation5], %s132
    %v134 = vld [vmem:[%s133] sm:$0x3]
    %s135 = scalar_lea.vmem [#allocation2], 32
    %136 = vst.msk [vmem:[%s135] ss:$8 sm:$0x3] %vm107, %v134
    %137 = vst.msk [vmem:[%s135] ss:$8 sm:$0x0] %vm107, %v134
    %s138 = sld [smem:[#allocation4 + $0xa]]
    %s139 = smul.u32 %s138, 2
    %s140 = scalar_lea.vmem [#allocation5], %s139
    %v141 = vld [vmem:[%s140] sm:$0x3]
    %s142 = scalar_lea.vmem [#allocation2], 33
    %143 = vst.msk [vmem:[%s142] ss:$8 sm:$0x3] %vm107, %v141
    %144 = vst.msk [vmem:[%s142] ss:$8 sm:$0x0] %vm107, %v141
    %s145 = sld [smem:[#allocation4 + $0x3]]
    %s146 = smul.u32 %s145, 2
    %s147 = scalar_lea.vmem [#allocation5], %s146
    %v148 = vld [vmem:[%s147] sm:$0x3]
    %s149 = scalar_lea.vmem [#allocation2], 48
    %150 = vst.msk [vmem:[%s149] ss:$8 sm:$0x3] %vm107, %v148
    %151 = vst.msk [vmem:[%s149] ss:$8 sm:$0x0] %vm107, %v148
    %s152 = sld [smem:[#allocation4 + $0xb]]
    %s153 = smul.u32 %s152, 2
    %s154 = scalar_lea.vmem [#allocation5], %s153
    %v155 = vld [vmem:[%s154] sm:$0x3]
    %s156 = scalar_lea.vmem [#allocation2], 49
    %157 = vst.msk [vmem:[%s156] ss:$8 sm:$0x3] %vm107, %v155
    %158 = vst.msk [vmem:[%s156] ss:$8 sm:$0x0] %vm107, %v155
    %s159 = sld [smem:[#allocation4 + $0x4]]
    %s160 = smul.u32 %s159, 2
    %s161 = scalar_lea.vmem [#allocation5], %s160
    %v162 = vld [vmem:[%s161] sm:$0x3]
    %s163 = scalar_lea.vmem [#allocation2], 64
    %164 = vst.msk [vmem:[%s163] ss:$8 sm:$0x3] %vm107, %v162
    %165 = vst.msk [vmem:[%s163] ss:$8 sm:$0x0] %vm107, %v162
    %s166 = sld [smem:[#allocation4 + $0xc]]
    %s167 = smul.u32 %s166, 2
    %s168 = scalar_lea.vmem [#allocation5], %s167
    %v169 = vld [vmem:[%s168] sm:$0x3]
    %s170 = scalar_lea.vmem [#allocation2], 65
    %171 = vst.msk [vmem:[%s170] ss:$8 sm:$0x3] %vm107, %v169
    %172 = vst.msk [vmem:[%s170] ss:$8 sm:$0x0] %vm107, %v169
    %s173 = sld [smem:[#allocation4 + $0x5]]
    %s174 = smul.u32 %s173, 2
    %s175 = scalar_lea.vmem [#allocation5], %s174
    %v176 = vld [vmem:[%s175] sm:$0x3]
    %s177 = scalar_lea.vmem [#allocation2], 80
    %178 = vst.msk [vmem:[%s177] ss:$8 sm:$0x3] %vm107, %v176
    %179 = vst.msk [vmem:[%s177] ss:$8 sm:$0x0] %vm107, %v176
    %s180 = sld [smem:[#allocation4 + $0xd]]
    %s181 = smul.u32 %s180, 2
    %s182 = scalar_lea.vmem [#allocation5], %s181
    %v183 = vld [vmem:[%s182] sm:$0x3]
    %s184 = scalar_lea.vmem [#allocation2], 81
    %185 = vst.msk [vmem:[%s184] ss:$8 sm:$0x3] %vm107, %v183
    %186 = vst.msk [vmem:[%s184] ss:$8 sm:$0x0] %vm107, %v183
    %s187 = sld [smem:[#allocation4 + $0x6]]
    %s188 = smul.u32 %s187, 2
    %s189 = scalar_lea.vmem [#allocation5], %s188
    %v190 = vld [vmem:[%s189] sm:$0x3]
    %s191 = scalar_lea.vmem [#allocation2], 96
    %192 = vst.msk [vmem:[%s191] ss:$8 sm:$0x3] %vm107, %v190
    %193 = vst.msk [vmem:[%s191] ss:$8 sm:$0x0] %vm107, %v190
    %s194 = sld [smem:[#allocation4 + $0xe]]
    %s195 = smul.u32 %s194, 2
    %s196 = scalar_lea.vmem [#allocation5], %s195
    %v197 = vld [vmem:[%s196] sm:$0x3]
    %s198 = scalar_lea.vmem [#allocation2], 97
    %199 = vst.msk [vmem:[%s198] ss:$8 sm:$0x3] %vm107, %v197
    %200 = vst.msk [vmem:[%s198] ss:$8 sm:$0x0] %vm107, %v197
    %s201 = sld [smem:[#allocation4 + $0x7]]
    %s202 = smul.u32 %s201, 2
    %s203 = scalar_lea.vmem [#allocation5], %s202
    %v204 = vld [vmem:[%s203] sm:$0x3]
    %s205 = scalar_lea.vmem [#allocation2], 112
    %206 = vst.msk [vmem:[%s205] ss:$8 sm:$0x3] %vm107, %v204
    %207 = vst.msk [vmem:[%s205] ss:$8 sm:$0x0] %vm107, %v204
    %s208 = sld [smem:[#allocation4 + $0xf]]
    %s209 = smul.u32 %s208, 2
    %s210 = scalar_lea.vmem [#allocation5], %s209
    %v211 = vld [vmem:[%s210] sm:$0x3]
    %s212 = scalar_lea.vmem [#allocation2], 113
    %213 = vst.msk [vmem:[%s212] ss:$8 sm:$0x3] %vm107, %v211
    %214 = vst.msk [vmem:[%s212] ss:$8 sm:$0x0] %vm107, %v211
    %v215 = vld [vmem:[#allocation2] sm:$0xff]
    %v216 = vld [vmem:[#allocation2 + $0x8] sm:$0xff]
    %v217 = vld [vmem:[#allocation2 + $0x10] sm:$0xff]
    %v218 = vld [vmem:[#allocation2 + $0x18] sm:$0xff]
    %v219 = vld [vmem:[#allocation2 + $0x20] sm:$0xff]
    %v220 = vld [vmem:[#allocation2 + $0x28] sm:$0xff]
    %v221 = vld [vmem:[#allocation2 + $0x30] sm:$0xff]
    %v222 = vld [vmem:[#allocation2 + $0x38] sm:$0xff]
    %v223 = vld [vmem:[#allocation2 + $0x40] sm:$0xff]
    %v224 = vld [vmem:[#allocation2 + $0x48] sm:$0xff]
    %v225 = vld [vmem:[#allocation2 + $0x50] sm:$0xff]
    %v226 = vld [vmem:[#allocation2 + $0x58] sm:$0xff]
    %v227 = vld [vmem:[#allocation2 + $0x60] sm:$0xff]
    %v228 = vld [vmem:[#allocation2 + $0x68] sm:$0xff]
    %v229 = vld [vmem:[#allocation2 + $0x70] sm:$0xff]
    %v230 = vld [vmem:[#allocation2 + $0x78] sm:$0xff]
    %v231 = vld [vmem:[#allocation8] sm:$0xff]
    %v232 = vld [vmem:[#allocation8 + $0x8] sm:$0xff]
    %v233 = vld [vmem:[#allocation8 + $0x10] sm:$0xff]
    %v234 = vld [vmem:[#allocation8 + $0x18] sm:$0xff]
    %v235 = vld [vmem:[#allocation8 + $0x20] sm:$0xff]
    %v236 = vld [vmem:[#allocation8 + $0x28] sm:$0xff]
    %v237 = vld [vmem:[#allocation8 + $0x30] sm:$0xff]
    %v238 = vld [vmem:[#allocation8 + $0x38] sm:$0xff]
    %v239 = vld [vmem:[#allocation8 + $0x40] sm:$0xff]
    %v240 = vld [vmem:[#allocation8 + $0x48] sm:$0xff]
    %v241 = vld [vmem:[#allocation8 + $0x50] sm:$0xff]
    %v242 = vld [vmem:[#allocation8 + $0x58] sm:$0xff]
    %v243 = vld [vmem:[#allocation8 + $0x60] sm:$0xff]
    %v244 = vld [vmem:[#allocation8 + $0x68] sm:$0xff]
    %v245 = vld [vmem:[#allocation8 + $0x70] sm:$0xff]
    %v246 = vld [vmem:[#allocation8 + $0x78] sm:$0xff]
    %v247 = vld [vmem:[#allocation8 + $0x80] sm:$0xff]
    %v248 = vld [vmem:[#allocation8 + $0x88] sm:$0xff]
    %v249 = vld [vmem:[#allocation8 + $0x90] sm:$0xff]
    %v250 = vld [vmem:[#allocation8 + $0x98] sm:$0xff]
    %v251 = vld [vmem:[#allocation8 + $0xa0] sm:$0xff]
    %v252 = vld [vmem:[#allocation8 + $0xa8] sm:$0xff]
    %v253 = vld [vmem:[#allocation8 + $0xb0] sm:$0xff]
    %v254 = vld [vmem:[#allocation8 + $0xb8] sm:$0xff]
    %v255 = vld [vmem:[#allocation8 + $0xc0] sm:$0xff]
    %v256 = vld [vmem:[#allocation8 + $0xc8] sm:$0xff]
    %v257 = vld [vmem:[#allocation8 + $0xd0] sm:$0xff]
    %v258 = vld [vmem:[#allocation8 + $0xd8] sm:$0xff]
    %v259 = vld [vmem:[#allocation8 + $0xe0] sm:$0xff]
    %v260 = vld [vmem:[#allocation8 + $0xe8] sm:$0xff]
    %v261 = vld [vmem:[#allocation8 + $0xf0] sm:$0xff]
    %v262 = vld [vmem:[#allocation8 + $0xf8] sm:$0xff]
    %v263 = vld [vmem:[%s4] sm:$0x1]
    %v265 = vlaneseq
    %v266 = vshrl.u32 %v265, 7
    %v267 = vsub.s32 0, %v266
    %v268 = vrot.slane %v263, %v267
    %270 = vmatprep.subr.mxu0 0.0
    %271 = vmatpush1.msra.mxu0 %v231
    %272 = vmatprep.subr.mxu0 0.0
    %273 = vmatpush1.msra.mxu0 %v232
    %274 = vmatprep.subr.mxu0 0.0
    %275 = vmatpush1.msra.mxu0 %v233
    %276 = vmatprep.subr.mxu0 0.0
    %277 = vmatpush1.msra.mxu0 %v234
    %278 = vmatprep.subr.mxu0 0.0
    %279 = vmatpush1.msra.mxu0 %v235
    %280 = vmatprep.subr.mxu0 0.0
    %281 = vmatpush1.msra.mxu0 %v236
    %282 = vmatprep.subr.mxu0 0.0
    %283 = vmatpush1.msra.mxu0 %v237
    %284 = vmatprep.subr.mxu0 0.0
    %285 = vmatpush1.msra.mxu0 %v238
    %286 = vmatprep.subr.mxu0 0.0
    %287 = vmatpush1.msra.mxu0 %v239
    %288 = vmatprep.subr.mxu0 0.0
    %289 = vmatpush1.msra.mxu0 %v240
    %290 = vmatprep.subr.mxu0 0.0
    %291 = vmatpush1.msra.mxu0 %v241
    %292 = vmatprep.subr.mxu0 0.0
    %293 = vmatpush1.msra.mxu0 %v242
    %294 = vmatprep.subr.mxu0 0.0
    %295 = vmatpush1.msra.mxu0 %v243
    %296 = vmatprep.subr.mxu0 0.0
    %297 = vmatpush1.msra.mxu0 %v244
    %298 = vmatprep.subr.mxu0 0.0
    %299 = vmatpush1.msra.mxu0 %v245
    %300 = vmatprep.subr.mxu0 0.0
    %301 = vmatpush1.msra.mxu0 %v246
    %302 = vmatprep.subr.mxu0 0.0
    %303 = vmatpush1.msra.mxu0 %v247
    %304 = vmatprep.subr.mxu0 0.0
    %305 = vmatpush1.msra.mxu0 %v248
    %306 = vmatprep.subr.mxu0 0.0
    %307 = vmatpush1.msra.mxu0 %v249
    %308 = vmatprep.subr.mxu0 0.0
    %309 = vmatpush1.msra.mxu0 %v250
    %310 = vmatprep.subr.mxu0 0.0
    %311 = vmatpush1.msra.mxu0 %v251
    %312 = vmatprep.subr.mxu0 0.0
    %313 = vmatpush1.msra.mxu0 %v252
    %314 = vmatprep.subr.mxu0 0.0
    %315 = vmatpush1.msra.mxu0 %v253
    %316 = vmatprep.subr.mxu0 0.0
    %317 = vmatpush1.msra.mxu0 %v254
    %318 = vmatprep.subr.mxu0 0.0
    %319 = vmatpush1.msra.mxu0 %v255
    %320 = vmatprep.subr.mxu0 0.0
    %321 = vmatpush1.msra.mxu0 %v256
    %322 = vmatprep.subr.mxu0 0.0
    %323 = vmatpush1.msra.mxu0 %v257
    %324 = vmatprep.subr.mxu0 0.0
    %325 = vmatpush1.msra.mxu0 %v258
    %326 = vmatprep.subr.mxu0 0.0
    %327 = vmatpush1.msra.mxu0 %v259
    %328 = vmatprep.subr.mxu0 0.0
    %329 = vmatpush1.msra.mxu0 %v260
    %330 = vmatprep.subr.mxu0 0.0
    %331 = vmatpush1.msra.mxu0 %v261
    %332 = vmatprep.subr.mxu0 0.0
    %333 = vmatpush1.msra.mxu0 %v262
    %334 = vmatprep.mubr.f32.mxu0 %v216
    %335 = vmatmul.mubr.f32.gmra.mrb[0].mxu0 %v215
    %v336 = vpop.f32.mrb[0].mxu0
    %v337 = vadd.f32 %v268, %v336
    %v338 = vpop.f32.mrb[0].mxu0
    %339 = vmatprep.mubr.f32.mxu0 %v218
    %340 = vmatmul.mubr.f32.gmra.mrb[0].mxu0 %v217
    %v341 = vpop.f32.mrb[0].mxu0
    %v342 = vadd.f32 %v268, %v341
    %v343 = vpop.f32.mrb[0].mxu0
    %344 = vmatprep.mubr.f32.mxu0 %v220
    %345 = vmatmul.mubr.f32.gmra.mrb[0].mxu0 %v219
    %v346 = vpop.f32.mrb[0].mxu0
    %v347 = vadd.f32 %v268, %v346
    %v348 = vpop.f32.mrb[0].mxu0
    %349 = vmatprep.mubr.f32.mxu0 %v222
    %350 = vmatmul.mubr.f32.gmra.mrb[0].mxu0 %v221
    %v351 = vpop.f32.mrb[0].mxu0
    %v352 = vadd.f32 %v268, %v351
    %v353 = vpop.f32.mrb[0].mxu0
    %354 = vmatprep.mubr.f32.mxu0 %v224
    %355 = vmatmul.mubr.f32.gmra.mrb[0].mxu0 %v223
    %v356 = vpop.f32.mrb[0].mxu0
    %v357 = vadd.f32 %v268, %v356
    %v358 = vpop.f32.mrb[0].mxu0
    %359 = vmatprep.mubr.f32.mxu0 %v226
    %360 = vmatmul.mubr.f32.gmra.mrb[0].mxu0 %v225
    %v361 = vpop.f32.mrb[0].mxu0
    %v362 = vadd.f32 %v268, %v361
    %v363 = vpop.f32.mrb[0].mxu0
    %364 = vmatprep.mubr.f32.mxu0 %v228
    %365 = vmatmul.mubr.f32.gmra.mrb[0].mxu0 %v227
    %v366 = vpop.f32.mrb[0].mxu0
    %v367 = vadd.f32 %v268, %v366
    %v368 = vpop.f32.mrb[0].mxu0
    %369 = vmatprep.mubr.f32.mxu0 %v230
    %370 = vmatmul.mubr.f32.gmra.mrb[0].mxu0 %v229
    %v371 = vpop.f32.mrb[0].mxu0
    %v372 = vadd.f32 %v268, %v371
    %v373 = vpop.f32.mrb[0].mxu0
    %374 = vdwg.mxu0
    %v375 = vld [vmem:[#allocation10] sm:$0xff]
    %v376 = vld [vmem:[#allocation10 + $0x8] sm:$0xff]
    %v377 = vld [vmem:[#allocation10 + $0x10] sm:$0xff]
    %v378 = vld [vmem:[#allocation10 + $0x18] sm:$0xff]
    %v379 = vlaneseq
    %v380 = vand.u32 %v379, 127
    %vm381 = vcmp.ge.s32.totalorder %v380, 64
    %vm382 = vcmp.lt.s32.totalorder %v380, 96
    %vm383 = vmand %vm381, %vm382
    %vm384 = vcmask 261120
    %v386 = vsel %vm384, 0.0, 0
    %388 = vmatprep.subr.mxu0 0.0
    %389 = vmatpush1.msra.mxu0 %v375
    %390 = vmatprep.subr.mxu0 0.0
    %391 = vmatpush1.msra.mxu0 %v376
    %392 = vmatprep.subr.mxu0 0.0
    %393 = vmatpush1.msra.mxu0 %v377
    %394 = vmatprep.subr.mxu0 0.0
    %395 = vmatpush1.msra.mxu0 %v378
    %396 = vmatprep.subr.mxu0 0.0
    %397 = vmatpush1.msra.mxu0 0.0
    %398 = vmatprep.subr.mxu0 0.0
    %399 = vmatpush1.msra.mxu0 0.0
    %400 = vmatprep.subr.mxu0 0.0
    %401 = vmatpush1.msra.mxu0 0.0
    %402 = vmatprep.subr.mxu0 0.0
    %403 = vmatpush1.msra.mxu0 0.0
    %404 = vmatprep.subr.mxu0 0.0
    %405 = vmatpush1.msra.mxu0 0.0
    %406 = vmatprep.subr.mxu0 0.0
    %407 = vmatpush1.msra.mxu0 0.0
    %408 = vmatprep.subr.mxu0 0.0
    %409 = vmatpush1.msra.mxu0 0.0
    %410 = vmatprep.subr.mxu0 0.0
    %411 = vmatpush1.msra.mxu0 0.0
    %412 = vmatprep.subr.mxu0 0.0
    %413 = vmatpush1.msra.mxu0 0.0
    %414 = vmatprep.subr.mxu0 0.0
    %415 = vmatpush1.msra.mxu0 0.0
    %416 = vmatprep.subr.mxu0 0.0
    %417 = vmatpush1.msra.mxu0 0.0
    %418 = vmatprep.subr.mxu0 0.0
    %419 = vmatpush1.msra.mxu0 0.0
    %420 = vmatprep.subr.mxu0 0.0
    %421 = vmatpush1.msra.mxu0 0.0
    %422 = vmatprep.subr.mxu0 0.0
    %423 = vmatpush1.msra.mxu0 0.0
    %424 = vmatprep.subr.mxu0 0.0
    %425 = vmatpush1.msra.mxu0 0.0
    %426 = vmatprep.subr.mxu0 0.0
    %427 = vmatpush1.msra.mxu0 0.0
    %428 = vmatprep.subr.mxu0 0.0
    %429 = vmatpush1.msra.mxu0 0.0
    %430 = vmatprep.subr.mxu0 0.0
    %431 = vmatpush1.msra.mxu0 0.0
    %432 = vmatprep.subr.mxu0 0.0
    %433 = vmatpush1.msra.mxu0 0.0
    %434 = vmatprep.subr.mxu0 0.0
    %435 = vmatpush1.msra.mxu0 0.0
    %436 = vmatprep.subr.mxu0 0.0
    %437 = vmatpush1.msra.mxu0 0.0
    %438 = vmatprep.subr.mxu0 0.0
    %439 = vmatpush1.msra.mxu0 0.0
    %440 = vmatprep.subr.mxu0 0.0
    %441 = vmatpush1.msra.mxu0 0.0
    %442 = vmatprep.subr.mxu0 0.0
    %443 = vmatpush1.msra.mxu0 0.0
    %444 = vmatprep.subr.mxu0 0.0
    %445 = vmatpush1.msra.mxu0 0.0
    %446 = vmatprep.subr.mxu0 0.0
    %447 = vmatpush1.msra.mxu0 0.0
    %448 = vmatprep.subr.mxu0 0.0
    %449 = vmatpush1.msra.mxu0 0.0
    %450 = vmatprep.subr.mxu0 0.0
    %451 = vmatpush1.msra.mxu0 0.0
    %452 = vmatprep.mubr.f32.mxu0 0.0
    %453 = vmatmul.mubr.f32.gmra.mrb[0].mxu0 %v386
    %v454 = vpop.f32.mrb[0].mxu0
    %v455 = vadd.f32 0.0, %v454
    %v456 = vpop.f32.mrb[0].mxu0
    %457 = vdwg.mxu0
    %v458 = vadd.f32 %v337, %v455
    %v459 = vadd.f32 %v458, %v458
    %v460 = vsel %vm383, %v459, %v458
    %v461 = vxor.u32 %v460, 2147483648
    %v462 = vmul.f32 %v461, 1.442695
    %v463 = vpow.pop %v462
    %v464 = vadd.f32 %v463, 1.0
    %v465 = vrcp.pop %v464
    %v466 = vmul.f32 1.0, %v465
    %v467 = vadd.f32 %v466, %v466
    %v468 = vsub.f32 %v467, 1.0
    %v469 = vsel %vm383, %v468, %v466
    %v470 = vmul.f32 %v469, 0.0
    %472 = vrot.lane.b32.xlu0 %v469, 64
    %v473 = vpop.permute.xlu0 %472
    %v475 = vmul.f32 %v469, %v473
    %477 = vrot.lane.b32.xlu0 %v475, 32
    %v478 = vpop.permute.xlu0 %477
    %v480 = vadd.f32 %v470, %v478
    %v481 = vtanh.pop %v480
    %483 = vrot.lane.b32.xlu0 %v481, 64
    %v484 = vpop.permute.xlu0 %483
    %v486 = vmul.f32 %v469, %v484
    %488 = vrot.lane.b32.xlu0 %v486, 32
    %v489 = vpop.permute.xlu0 %488
    %v490 = vsel %vm384, %v489, 0
    %492 = vmatprep.subr.mxu0 0.0
    %493 = vmatpush1.msra.mxu0 %v375
    %494 = vmatprep.subr.mxu0 0.0
    %495 = vmatpush1.msra.mxu0 %v376
    %496 = vmatprep.subr.mxu0 0.0
    %497 = vmatpush1.msra.mxu0 %v377
    %498 = vmatprep.subr.mxu0 0.0
    %499 = vmatpush1.msra.mxu0 %v378
    %500 = vmatprep.subr.mxu0 0.0
    %501 = vmatpush1.msra.mxu0 0.0
    %502 = vmatprep.subr.mxu0 0.0
    %503 = vmatpush1.msra.mxu0 0.0
    %504 = vmatprep.subr.mxu0 0.0
    %505 = vmatpush1.msra.mxu0 0.0
    %506 = vmatprep.subr.mxu0 0.0
    %507 = vmatpush1.msra.mxu0 0.0
    %508 = vmatprep.subr.mxu0 0.0
    %509 = vmatpush1.msra.mxu0 0.0
    %510 = vmatprep.subr.mxu0 0.0
    %511 = vmatpush1.msra.mxu0 0.0
    %512 = vmatprep.subr.mxu0 0.0
    %513 = vmatpush1.msra.mxu0 0.0
    %514 = vmatprep.subr.mxu0 0.0
    %515 = vmatpush1.msra.mxu0 0.0
    %516 = vmatprep.subr.mxu0 0.0
    %517 = vmatpush1.msra.mxu0 0.0
    %518 = vmatprep.subr.mxu0 0.0
    %519 = vmatpush1.msra.mxu0 0.0
    %520 = vmatprep.subr.mxu0 0.0
    %521 = vmatpush1.msra.mxu0 0.0
    %522 = vmatprep.subr.mxu0 0.0
    %523 = vmatpush1.msra.mxu0 0.0
    %524 = vmatprep.subr.mxu0 0.0
    %525 = vmatpush1.msra.mxu0 0.0
    %526 = vmatprep.subr.mxu0 0.0
    %527 = vmatpush1.msra.mxu0 0.0
    %528 = vmatprep.subr.mxu0 0.0
    %529 = vmatpush1.msra.mxu0 0.0
    %530 = vmatprep.subr.mxu0 0.0
    %531 = vmatpush1.msra.mxu0 0.0
    %532 = vmatprep.subr.mxu0 0.0
    %533 = vmatpush1.msra.mxu0 0.0
    %534 = vmatprep.subr.mxu0 0.0
    %535 = vmatpush1.msra.mxu0 0.0
    %536 = vmatprep.subr.mxu0 0.0
    %537 = vmatpush1.msra.mxu0 0.0
    %538 = vmatprep.subr.mxu0 0.0
    %539 = vmatpush1.msra.mxu0 0.0
    %540 = vmatprep.subr.mxu0 0.0
    %541 = vmatpush1.msra.mxu0 0.0
    %542 = vmatprep.subr.mxu0 0.0
    %543 = vmatpush1.msra.mxu0 0.0
    %544 = vmatprep.subr.mxu0 0.0
    %545 = vmatpush1.msra.mxu0 0.0
    %546 = vmatprep.subr.mxu0 0.0
    %547 = vmatpush1.msra.mxu0 0.0
    %548 = vmatprep.subr.mxu0 0.0
    %549 = vmatpush1.msra.mxu0 0.0
    %550 = vmatprep.subr.mxu0 0.0
    %551 = vmatpush1.msra.mxu0 0.0
    %552 = vmatprep.subr.mxu0 0.0
    %553 = vmatpush1.msra.mxu0 0.0
    %554 = vmatprep.subr.mxu0 0.0
    %555 = vmatpush1.msra.mxu0 0.0
    %556 = vmatprep.mubr.f32.mxu0 0.0
    %557 = vmatmul.mubr.f32.gmra.mrb[0].mxu0 %v490
    %v558 = vpop.f32.mrb[0].mxu0
    %v559 = vadd.f32 0.0, %v558
    %v560 = vpop.f32.mrb[0].mxu0
    %561 = vdwg.mxu0
    %v562 = vadd.f32 %v342, %v559
    %v563 = vadd.f32 %v562, %v562
    %v564 = vsel %vm383, %v563, %v562
    %v565 = vxor.u32 %v564, 2147483648
    %v566 = vmul.f32 %v565, 1.442695
    %v567 = vpow.pop %v566
    %v568 = vadd.f32 %v567, 1.0
    %v569 = vrcp.pop %v568
    %v570 = vmul.f32 1.0, %v569
    %v571 = vadd.f32 %v570, %v570
    %v572 = vsub.f32 %v571, 1.0
    %v573 = vsel %vm383, %v572, %v570
    %v574 = vmul.f32 %v573, %v480
    %576 = vrot.lane.b32.xlu0 %v573, 64
    %v577 = vpop.permute.xlu0 %576
    %v579 = vmul.f32 %v573, %v577
    %581 = vrot.lane.b32.xlu0 %v579, 32
    %v582 = vpop.permute.xlu0 %581
    %v584 = vadd.f32 %v574, %v582
    %v585 = vtanh.pop %v584
    %587 = vrot.lane.b32.xlu0 %v585, 64
    %v588 = vpop.permute.xlu0 %587
    %v590 = vmul.f32 %v573, %v588
    %592 = vrot.lane.b32.xlu0 %v590, 32
    %v593 = vpop.permute.xlu0 %592
    %v594 = vsel %vm384, %v593, 0
    %596 = vmatprep.subr.mxu0 0.0
    %597 = vmatpush1.msra.mxu0 %v375
    %598 = vmatprep.subr.mxu0 0.0
    %599 = vmatpush1.msra.mxu0 %v376
    %600 = vmatprep.subr.mxu0 0.0
    %601 = vmatpush1.msra.mxu0 %v377
    %602 = vmatprep.subr.mxu0 0.0
    %603 = vmatpush1.msra.mxu0 %v378
    %604 = vmatprep.subr.mxu0 0.0
    %605 = vmatpush1.msra.mxu0 0.0
    %606 = vmatprep.subr.mxu0 0.0
    %607 = vmatpush1.msra.mxu0 0.0
    %608 = vmatprep.subr.mxu0 0.0
    %609 = vmatpush1.msra.mxu0 0.0
    %610 = vmatprep.subr.mxu0 0.0
    %611 = vmatpush1.msra.mxu0 0.0
    %612 = vmatprep.subr.mxu0 0.0
    %613 = vmatpush1.msra.mxu0 0.0
    %614 = vmatprep.subr.mxu0 0.0
    %615 = vmatpush1.msra.mxu0 0.0
    %616 = vmatprep.subr.mxu0 0.0
    %617 = vmatpush1.msra.mxu0 0.0
    %618 = vmatprep.subr.mxu0 0.0
    %619 = vmatpush1.msra.mxu0 0.0
    %620 = vmatprep.subr.mxu0 0.0
    %621 = vmatpush1.msra.mxu0 0.0
    %622 = vmatprep.subr.mxu0 0.0
    %623 = vmatpush1.msra.mxu0 0.0
    %624 = vmatprep.subr.mxu0 0.0
    %625 = vmatpush1.msra.mxu0 0.0
    %626 = vmatprep.subr.mxu0 0.0
    %627 = vmatpush1.msra.mxu0 0.0
    %628 = vmatprep.subr.mxu0 0.0
    %629 = vmatpush1.msra.mxu0 0.0
    %630 = vmatprep.subr.mxu0 0.0
    %631 = vmatpush1.msra.mxu0 0.0
    %632 = vmatprep.subr.mxu0 0.0
    %633 = vmatpush1.msra.mxu0 0.0
    %634 = vmatprep.subr.mxu0 0.0
    %635 = vmatpush1.msra.mxu0 0.0
    %636 = vmatprep.subr.mxu0 0.0
    %637 = vmatpush1.msra.mxu0 0.0
    %638 = vmatprep.subr.mxu0 0.0
    %639 = vmatpush1.msra.mxu0 0.0
    %640 = vmatprep.subr.mxu0 0.0
    %641 = vmatpush1.msra.mxu0 0.0
    %642 = vmatprep.subr.mxu0 0.0
    %643 = vmatpush1.msra.mxu0 0.0
    %644 = vmatprep.subr.mxu0 0.0
    %645 = vmatpush1.msra.mxu0 0.0
    %646 = vmatprep.subr.mxu0 0.0
    %647 = vmatpush1.msra.mxu0 0.0
    %648 = vmatprep.subr.mxu0 0.0
    %649 = vmatpush1.msra.mxu0 0.0
    %650 = vmatprep.subr.mxu0 0.0
    %651 = vmatpush1.msra.mxu0 0.0
    %652 = vmatprep.subr.mxu0 0.0
    %653 = vmatpush1.msra.mxu0 0.0
    %654 = vmatprep.subr.mxu0 0.0
    %655 = vmatpush1.msra.mxu0 0.0
    %656 = vmatprep.subr.mxu0 0.0
    %657 = vmatpush1.msra.mxu0 0.0
    %658 = vmatprep.subr.mxu0 0.0
    %659 = vmatpush1.msra.mxu0 0.0
    %660 = vmatprep.mubr.f32.mxu0 0.0
    %661 = vmatmul.mubr.f32.gmra.mrb[0].mxu0 %v594
    %v662 = vpop.f32.mrb[0].mxu0
    %v663 = vadd.f32 0.0, %v662
    %v664 = vpop.f32.mrb[0].mxu0
    %665 = vdwg.mxu0
    %v666 = vadd.f32 %v347, %v663
    %v667 = vadd.f32 %v666, %v666
    %v668 = vsel %vm383, %v667, %v666
    %v669 = vxor.u32 %v668, 2147483648
    %v670 = vmul.f32 %v669, 1.442695
    %v671 = vpow.pop %v670
    %v672 = vadd.f32 %v671, 1.0
    %v673 = vrcp.pop %v672
    %v674 = vmul.f32 1.0, %v673
    %v675 = vadd.f32 %v674, %v674
    %v676 = vsub.f32 %v675, 1.0
    %v677 = vsel %vm383, %v676, %v674
    %v678 = vmul.f32 %v677, %v584
    %680 = vrot.lane.b32.xlu0 %v677, 64
    %v681 = vpop.permute.xlu0 %680
    %v683 = vmul.f32 %v677, %v681
    %685 = vrot.lane.b32.xlu0 %v683, 32
    %v686 = vpop.permute.xlu0 %685
    %v688 = vadd.f32 %v678, %v686
    %v689 = vtanh.pop %v688
    %691 = vrot.lane.b32.xlu0 %v689, 64
    %v692 = vpop.permute.xlu0 %691
    %v694 = vmul.f32 %v677, %v692
    %696 = vrot.lane.b32.xlu0 %v694, 32
    %v697 = vpop.permute.xlu0 %696
    %v698 = vsel %vm384, %v697, 0
    %700 = vmatprep.subr.mxu0 0.0
    %701 = vmatpush1.msra.mxu0 %v375
    %702 = vmatprep.subr.mxu0 0.0
    %703 = vmatpush1.msra.mxu0 %v376
    %704 = vmatprep.subr.mxu0 0.0
    %705 = vmatpush1.msra.mxu0 %v377
    %706 = vmatprep.subr.mxu0 0.0
    %707 = vmatpush1.msra.mxu0 %v378
    %708 = vmatprep.subr.mxu0 0.0
    %709 = vmatpush1.msra.mxu0 0.0
    %710 = vmatprep.subr.mxu0 0.0
    %711 = vmatpush1.msra.mxu0 0.0
    %712 = vmatprep.subr.mxu0 0.0
    %713 = vmatpush1.msra.mxu0 0.0
    %714 = vmatprep.subr.mxu0 0.0
    %715 = vmatpush1.msra.mxu0 0.0
    %716 = vmatprep.subr.mxu0 0.0
    %717 = vmatpush1.msra.mxu0 0.0
    %718 = vmatprep.subr.mxu0 0.0
    %719 = vmatpush1.msra.mxu0 0.0
    %720 = vmatprep.subr.mxu0 0.0
    %721 = vmatpush1.msra.mxu0 0.0
    %722 = vmatprep.subr.mxu0 0.0
    %723 = vmatpush1.msra.mxu0 0.0
    %724 = vmatprep.subr.mxu0 0.0
    %725 = vmatpush1.msra.mxu0 0.0
    %726 = vmatprep.subr.mxu0 0.0
    %727 = vmatpush1.msra.mxu0 0.0
    %728 = vmatprep.subr.mxu0 0.0
    %729 = vmatpush1.msra.mxu0 0.0
    %730 = vmatprep.subr.mxu0 0.0
    %731 = vmatpush1.msra.mxu0 0.0
    %732 = vmatprep.subr.mxu0 0.0
    %733 = vmatpush1.msra.mxu0 0.0
    %734 = vmatprep.subr.mxu0 0.0
    %735 = vmatpush1.msra.mxu0 0.0
    %736 = vmatprep.subr.mxu0 0.0
    %737 = vmatpush1.msra.mxu0 0.0
    %738 = vmatprep.subr.mxu0 0.0
    %739 = vmatpush1.msra.mxu0 0.0
    %740 = vmatprep.subr.mxu0 0.0
    %741 = vmatpush1.msra.mxu0 0.0
    %742 = vmatprep.subr.mxu0 0.0
    %743 = vmatpush1.msra.mxu0 0.0
    %744 = vmatprep.subr.mxu0 0.0
    %745 = vmatpush1.msra.mxu0 0.0
    %746 = vmatprep.subr.mxu0 0.0
    %747 = vmatpush1.msra.mxu0 0.0
    %748 = vmatprep.subr.mxu0 0.0
    %749 = vmatpush1.msra.mxu0 0.0
    %750 = vmatprep.subr.mxu0 0.0
    %751 = vmatpush1.msra.mxu0 0.0
    %752 = vmatprep.subr.mxu0 0.0
    %753 = vmatpush1.msra.mxu0 0.0
    %754 = vmatprep.subr.mxu0 0.0
    %755 = vmatpush1.msra.mxu0 0.0
    %756 = vmatprep.subr.mxu0 0.0
    %757 = vmatpush1.msra.mxu0 0.0
    %758 = vmatprep.subr.mxu0 0.0
    %759 = vmatpush1.msra.mxu0 0.0
    %760 = vmatprep.subr.mxu0 0.0
    %761 = vmatpush1.msra.mxu0 0.0
    %762 = vmatprep.subr.mxu0 0.0
    %763 = vmatpush1.msra.mxu0 0.0
    %764 = vmatprep.mubr.f32.mxu0 0.0
    %765 = vmatmul.mubr.f32.gmra.mrb[0].mxu0 %v698
    %v766 = vpop.f32.mrb[0].mxu0
    %v767 = vadd.f32 0.0, %v766
    %v768 = vpop.f32.mrb[0].mxu0
    %769 = vdwg.mxu0
    %v770 = vadd.f32 %v352, %v767
    %v771 = vadd.f32 %v770, %v770
    %v772 = vsel %vm383, %v771, %v770
    %v773 = vxor.u32 %v772, 2147483648
    %v774 = vmul.f32 %v773, 1.442695
    %v775 = vpow.pop %v774
    %v776 = vadd.f32 %v775, 1.0
    %v777 = vrcp.pop %v776
    %v778 = vmul.f32 1.0, %v777
    %v779 = vadd.f32 %v778, %v778
    %v780 = vsub.f32 %v779, 1.0
    %v781 = vsel %vm383, %v780, %v778
    %v782 = vmul.f32 %v781, %v688
    %784 = vrot.lane.b32.xlu0 %v781, 64
    %v785 = vpop.permute.xlu0 %784
    %v787 = vmul.f32 %v781, %v785
    %789 = vrot.lane.b32.xlu0 %v787, 32
    %v790 = vpop.permute.xlu0 %789
    %v792 = vadd.f32 %v782, %v790
    %v793 = vtanh.pop %v792
    %795 = vrot.lane.b32.xlu0 %v793, 64
    %v796 = vpop.permute.xlu0 %795
    %v798 = vmul.f32 %v781, %v796
    %800 = vrot.lane.b32.xlu0 %v798, 32
    %v801 = vpop.permute.xlu0 %800
    %v802 = vsel %vm384, %v801, 0
    %804 = vmatprep.subr.mxu0 0.0
    %805 = vmatpush1.msra.mxu0 %v375
    %806 = vmatprep.subr.mxu0 0.0
    %807 = vmatpush1.msra.mxu0 %v376
    %808 = vmatprep.subr.mxu0 0.0
    %809 = vmatpush1.msra.mxu0 %v377
    %810 = vmatprep.subr.mxu0 0.0
    %811 = vmatpush1.msra.mxu0 %v378
    %812 = vmatprep.subr.mxu0 0.0
    %813 = vmatpush1.msra.mxu0 0.0
    %814 = vmatprep.subr.mxu0 0.0
    %815 = vmatpush1.msra.mxu0 0.0
    %816 = vmatprep.subr.mxu0 0.0
    %817 = vmatpush1.msra.mxu0 0.0
    %818 = vmatprep.subr.mxu0 0.0
    %819 = vmatpush1.msra.mxu0 0.0
    %820 = vmatprep.subr.mxu0 0.0
    %821 = vmatpush1.msra.mxu0 0.0
    %822 = vmatprep.subr.mxu0 0.0
    %823 = vmatpush1.msra.mxu0 0.0
    %824 = vmatprep.subr.mxu0 0.0
    %825 = vmatpush1.msra.mxu0 0.0
    %826 = vmatprep.subr.mxu0 0.0
    %827 = vmatpush1.msra.mxu0 0.0
    %828 = vmatprep.subr.mxu0 0.0
    %829 = vmatpush1.msra.mxu0 0.0
    %830 = vmatprep.subr.mxu0 0.0
    %831 = vmatpush1.msra.mxu0 0.0
    %832 = vmatprep.subr.mxu0 0.0
    %833 = vmatpush1.msra.mxu0 0.0
    %834 = vmatprep.subr.mxu0 0.0
    %835 = vmatpush1.msra.mxu0 0.0
    %836 = vmatprep.subr.mxu0 0.0
    %837 = vmatpush1.msra.mxu0 0.0
    %838 = vmatprep.subr.mxu0 0.0
    %839 = vmatpush1.msra.mxu0 0.0
    %840 = vmatprep.subr.mxu0 0.0
    %841 = vmatpush1.msra.mxu0 0.0
    %842 = vmatprep.subr.mxu0 0.0
    %843 = vmatpush1.msra.mxu0 0.0
    %844 = vmatprep.subr.mxu0 0.0
    %845 = vmatpush1.msra.mxu0 0.0
    %846 = vmatprep.subr.mxu0 0.0
    %847 = vmatpush1.msra.mxu0 0.0
    %848 = vmatprep.subr.mxu0 0.0
    %849 = vmatpush1.msra.mxu0 0.0
    %850 = vmatprep.subr.mxu0 0.0
    %851 = vmatpush1.msra.mxu0 0.0
    %852 = vmatprep.subr.mxu0 0.0
    %853 = vmatpush1.msra.mxu0 0.0
    %854 = vmatprep.subr.mxu0 0.0
    %855 = vmatpush1.msra.mxu0 0.0
    %856 = vmatprep.subr.mxu0 0.0
    %857 = vmatpush1.msra.mxu0 0.0
    %858 = vmatprep.subr.mxu0 0.0
    %859 = vmatpush1.msra.mxu0 0.0
    %860 = vmatprep.subr.mxu0 0.0
    %861 = vmatpush1.msra.mxu0 0.0
    %862 = vmatprep.subr.mxu0 0.0
    %863 = vmatpush1.msra.mxu0 0.0
    %864 = vmatprep.subr.mxu0 0.0
    %865 = vmatpush1.msra.mxu0 0.0
    %866 = vmatprep.subr.mxu0 0.0
    %867 = vmatpush1.msra.mxu0 0.0
    %868 = vmatprep.mubr.f32.mxu0 0.0
    %869 = vmatmul.mubr.f32.gmra.mrb[0].mxu0 %v802
    %v870 = vpop.f32.mrb[0].mxu0
    %v871 = vadd.f32 0.0, %v870
    %v872 = vpop.f32.mrb[0].mxu0
    %873 = vdwg.mxu0
    %v874 = vadd.f32 %v357, %v871
    %v875 = vadd.f32 %v874, %v874
    %v876 = vsel %vm383, %v875, %v874
    %v877 = vxor.u32 %v876, 2147483648
    %v878 = vmul.f32 %v877, 1.442695
    %v879 = vpow.pop %v878
    %v880 = vadd.f32 %v879, 1.0
    %v881 = vrcp.pop %v880
    %v882 = vmul.f32 1.0, %v881
    %v883 = vadd.f32 %v882, %v882
    %v884 = vsub.f32 %v883, 1.0
    %v885 = vsel %vm383, %v884, %v882
    %v886 = vmul.f32 %v885, %v792
    %888 = vrot.lane.b32.xlu0 %v885, 64
    %v889 = vpop.permute.xlu0 %888
    %v891 = vmul.f32 %v885, %v889
    %893 = vrot.lane.b32.xlu0 %v891, 32
    %v894 = vpop.permute.xlu0 %893
    %v896 = vadd.f32 %v886, %v894
    %v897 = vtanh.pop %v896
    %899 = vrot.lane.b32.xlu0 %v897, 64
    %v900 = vpop.permute.xlu0 %899
    %v902 = vmul.f32 %v885, %v900
    %904 = vrot.lane.b32.xlu0 %v902, 32
    %v905 = vpop.permute.xlu0 %904
    %v906 = vsel %vm384, %v905, 0
    %908 = vmatprep.subr.mxu0 0.0
    %909 = vmatpush1.msra.mxu0 %v375
    %910 = vmatprep.subr.mxu0 0.0
    %911 = vmatpush1.msra.mxu0 %v376
    %912 = vmatprep.subr.mxu0 0.0
    %913 = vmatpush1.msra.mxu0 %v377
    %914 = vmatprep.subr.mxu0 0.0
    %915 = vmatpush1.msra.mxu0 %v378
    %916 = vmatprep.subr.mxu0 0.0
    %917 = vmatpush1.msra.mxu0 0.0
    %918 = vmatprep.subr.mxu0 0.0
    %919 = vmatpush1.msra.mxu0 0.0
    %920 = vmatprep.subr.mxu0 0.0
    %921 = vmatpush1.msra.mxu0 0.0
    %922 = vmatprep.subr.mxu0 0.0
    %923 = vmatpush1.msra.mxu0 0.0
    %924 = vmatprep.subr.mxu0 0.0
    %925 = vmatpush1.msra.mxu0 0.0
    %926 = vmatprep.subr.mxu0 0.0
    %927 = vmatpush1.msra.mxu0 0.0
    %928 = vmatprep.subr.mxu0 0.0
    %929 = vmatpush1.msra.mxu0 0.0
    %930 = vmatprep.subr.mxu0 0.0
    %931 = vmatpush1.msra.mxu0 0.0
    %932 = vmatprep.subr.mxu0 0.0
    %933 = vmatpush1.msra.mxu0 0.0
    %934 = vmatprep.subr.mxu0 0.0
    %935 = vmatpush1.msra.mxu0 0.0
    %936 = vmatprep.subr.mxu0 0.0
    %937 = vmatpush1.msra.mxu0 0.0
    %938 = vmatprep.subr.mxu0 0.0
    %939 = vmatpush1.msra.mxu0 0.0
    %940 = vmatprep.subr.mxu0 0.0
    %941 = vmatpush1.msra.mxu0 0.0
    %942 = vmatprep.subr.mxu0 0.0
    %943 = vmatpush1.msra.mxu0 0.0
    %944 = vmatprep.subr.mxu0 0.0
    %945 = vmatpush1.msra.mxu0 0.0
    %946 = vmatprep.subr.mxu0 0.0
    %947 = vmatpush1.msra.mxu0 0.0
    %948 = vmatprep.subr.mxu0 0.0
    %949 = vmatpush1.msra.mxu0 0.0
    %950 = vmatprep.subr.mxu0 0.0
    %951 = vmatpush1.msra.mxu0 0.0
    %952 = vmatprep.subr.mxu0 0.0
    %953 = vmatpush1.msra.mxu0 0.0
    %954 = vmatprep.subr.mxu0 0.0
    %955 = vmatpush1.msra.mxu0 0.0
    %956 = vmatprep.subr.mxu0 0.0
    %957 = vmatpush1.msra.mxu0 0.0
    %958 = vmatprep.subr.mxu0 0.0
    %959 = vmatpush1.msra.mxu0 0.0
    %960 = vmatprep.subr.mxu0 0.0
    %961 = vmatpush1.msra.mxu0 0.0
    %962 = vmatprep.subr.mxu0 0.0
    %963 = vmatpush1.msra.mxu0 0.0
    %964 = vmatprep.subr.mxu0 0.0
    %965 = vmatpush1.msra.mxu0 0.0
    %966 = vmatprep.subr.mxu0 0.0
    %967 = vmatpush1.msra.mxu0 0.0
    %968 = vmatprep.subr.mxu0 0.0
    %969 = vmatpush1.msra.mxu0 0.0
    %970 = vmatprep.subr.mxu0 0.0
    %971 = vmatpush1.msra.mxu0 0.0
    %972 = vmatprep.mubr.f32.mxu0 0.0
    %973 = vmatmul.mubr.f32.gmra.mrb[0].mxu0 %v906
    %v974 = vpop.f32.mrb[0].mxu0
    %v975 = vadd.f32 0.0, %v974
    %v976 = vpop.f32.mrb[0].mxu0
    %977 = vdwg.mxu0
    %v978 = vadd.f32 %v362, %v975
    %v979 = vadd.f32 %v978, %v978
    %v980 = vsel %vm383, %v979, %v978
    %v981 = vxor.u32 %v980, 2147483648
    %v982 = vmul.f32 %v981, 1.442695
    %v983 = vpow.pop %v982
    %v984 = vadd.f32 %v983, 1.0
    %v985 = vrcp.pop %v984
    %v986 = vmul.f32 1.0, %v985
    %v987 = vadd.f32 %v986, %v986
    %v988 = vsub.f32 %v987, 1.0
    %v989 = vsel %vm383, %v988, %v986
    %v990 = vmul.f32 %v989, %v896
    %992 = vrot.lane.b32.xlu0 %v989, 64
    %v993 = vpop.permute.xlu0 %992
    %v995 = vmul.f32 %v989, %v993
    %997 = vrot.lane.b32.xlu0 %v995, 32
    %v998 = vpop.permute.xlu0 %997
    %v1000 = vadd.f32 %v990, %v998
    %v1001 = vtanh.pop %v1000
    %1003 = vrot.lane.b32.xlu0 %v1001, 64
    %v1004 = vpop.permute.xlu0 %1003
    %v1006 = vmul.f32 %v989, %v1004
    %1008 = vrot.lane.b32.xlu0 %v1006, 32
    %v1009 = vpop.permute.xlu0 %1008
    %v1010 = vsel %vm384, %v1009, 0
    %1012 = vmatprep.subr.mxu0 0.0
    %1013 = vmatpush1.msra.mxu0 %v375
    %1014 = vmatprep.subr.mxu0 0.0
    %1015 = vmatpush1.msra.mxu0 %v376
    %1016 = vmatprep.subr.mxu0 0.0
    %1017 = vmatpush1.msra.mxu0 %v377
    %1018 = vmatprep.subr.mxu0 0.0
    %1019 = vmatpush1.msra.mxu0 %v378
    %1020 = vmatprep.subr.mxu0 0.0
    %1021 = vmatpush1.msra.mxu0 0.0
    %1022 = vmatprep.subr.mxu0 0.0
    %1023 = vmatpush1.msra.mxu0 0.0
    %1024 = vmatprep.subr.mxu0 0.0
    %1025 = vmatpush1.msra.mxu0 0.0
    %1026 = vmatprep.subr.mxu0 0.0
    %1027 = vmatpush1.msra.mxu0 0.0
    %1028 = vmatprep.subr.mxu0 0.0
    %1029 = vmatpush1.msra.mxu0 0.0
    %1030 = vmatprep.subr.mxu0 0.0
    %1031 = vmatpush1.msra.mxu0 0.0
    %1032 = vmatprep.subr.mxu0 0.0
    %1033 = vmatpush1.msra.mxu0 0.0
    %1034 = vmatprep.subr.mxu0 0.0
    %1035 = vmatpush1.msra.mxu0 0.0
    %1036 = vmatprep.subr.mxu0 0.0
    %1037 = vmatpush1.msra.mxu0 0.0
    %1038 = vmatprep.subr.mxu0 0.0
    %1039 = vmatpush1.msra.mxu0 0.0
    %1040 = vmatprep.subr.mxu0 0.0
    %1041 = vmatpush1.msra.mxu0 0.0
    %1042 = vmatprep.subr.mxu0 0.0
    %1043 = vmatpush1.msra.mxu0 0.0
    %1044 = vmatprep.subr.mxu0 0.0
    %1045 = vmatpush1.msra.mxu0 0.0
    %1046 = vmatprep.subr.mxu0 0.0
    %1047 = vmatpush1.msra.mxu0 0.0
    %1048 = vmatprep.subr.mxu0 0.0
    %1049 = vmatpush1.msra.mxu0 0.0
    %1050 = vmatprep.subr.mxu0 0.0
    %1051 = vmatpush1.msra.mxu0 0.0
    %1052 = vmatprep.subr.mxu0 0.0
    %1053 = vmatpush1.msra.mxu0 0.0
    %1054 = vmatprep.subr.mxu0 0.0
    %1055 = vmatpush1.msra.mxu0 0.0
    %1056 = vmatprep.subr.mxu0 0.0
    %1057 = vmatpush1.msra.mxu0 0.0
    %1058 = vmatprep.subr.mxu0 0.0
    %1059 = vmatpush1.msra.mxu0 0.0
    %1060 = vmatprep.subr.mxu0 0.0
    %1061 = vmatpush1.msra.mxu0 0.0
    %1062 = vmatprep.subr.mxu0 0.0
    %1063 = vmatpush1.msra.mxu0 0.0
    %1064 = vmatprep.subr.mxu0 0.0
    %1065 = vmatpush1.msra.mxu0 0.0
    %1066 = vmatprep.subr.mxu0 0.0
    %1067 = vmatpush1.msra.mxu0 0.0
    %1068 = vmatprep.subr.mxu0 0.0
    %1069 = vmatpush1.msra.mxu0 0.0
    %1070 = vmatprep.subr.mxu0 0.0
    %1071 = vmatpush1.msra.mxu0 0.0
    %1072 = vmatprep.subr.mxu0 0.0
    %1073 = vmatpush1.msra.mxu0 0.0
    %1074 = vmatprep.subr.mxu0 0.0
    %1075 = vmatpush1.msra.mxu0 0.0
    %1076 = vmatprep.mubr.f32.mxu0 0.0
    %1077 = vmatmul.mubr.f32.gmra.mrb[0].mxu0 %v1010
    %v1078 = vpop.f32.mrb[0].mxu0
    %v1079 = vadd.f32 0.0, %v1078
    %v1080 = vpop.f32.mrb[0].mxu0
    %1081 = vdwg.mxu0
    %v1082 = vadd.f32 %v367, %v1079
    %v1083 = vadd.f32 %v1082, %v1082
    %v1084 = vsel %vm383, %v1083, %v1082
    %v1085 = vxor.u32 %v1084, 2147483648
    %v1086 = vmul.f32 %v1085, 1.442695
    %v1087 = vpow.pop %v1086
    %v1088 = vadd.f32 %v1087, 1.0
    %v1089 = vrcp.pop %v1088
    %v1090 = vmul.f32 1.0, %v1089
    %v1091 = vadd.f32 %v1090, %v1090
    %v1092 = vsub.f32 %v1091, 1.0
    %v1093 = vsel %vm383, %v1092, %v1090
    %v1094 = vmul.f32 %v1093, %v1000
    %1096 = vrot.lane.b32.xlu0 %v1093, 64
    %v1097 = vpop.permute.xlu0 %1096
    %v1099 = vmul.f32 %v1093, %v1097
    %1101 = vrot.lane.b32.xlu0 %v1099, 32
    %v1102 = vpop.permute.xlu0 %1101
    %v1104 = vadd.f32 %v1094, %v1102
    %v1105 = vtanh.pop %v1104
    %1107 = vrot.lane.b32.xlu0 %v1105, 64
    %v1108 = vpop.permute.xlu0 %1107
    %v1110 = vmul.f32 %v1093, %v1108
    %1112 = vrot.lane.b32.xlu0 %v1110, 32
    %v1113 = vpop.permute.xlu0 %1112
    %v1114 = vsel %vm384, %v1113, 0
    %1116 = vmatprep.subr.mxu0 0.0
    %1117 = vmatpush1.msra.mxu0 %v375
    %1118 = vmatprep.subr.mxu0 0.0
    %1119 = vmatpush1.msra.mxu0 %v376
    %1120 = vmatprep.subr.mxu0 0.0
    %1121 = vmatpush1.msra.mxu0 %v377
    %1122 = vmatprep.subr.mxu0 0.0
    %1123 = vmatpush1.msra.mxu0 %v378
    %1124 = vmatprep.subr.mxu0 0.0
    %1125 = vmatpush1.msra.mxu0 0.0
    %1126 = vmatprep.subr.mxu0 0.0
    %1127 = vmatpush1.msra.mxu0 0.0
    %1128 = vmatprep.subr.mxu0 0.0
    %1129 = vmatpush1.msra.mxu0 0.0
    %1130 = vmatprep.subr.mxu0 0.0
    %1131 = vmatpush1.msra.mxu0 0.0
    %1132 = vmatprep.subr.mxu0 0.0
    %1133 = vmatpush1.msra.mxu0 0.0
    %1134 = vmatprep.subr.mxu0 0.0
    %1135 = vmatpush1.msra.mxu0 0.0
    %1136 = vmatprep.subr.mxu0 0.0
    %1137 = vmatpush1.msra.mxu0 0.0
    %1138 = vmatprep.subr.mxu0 0.0
    %1139 = vmatpush1.msra.mxu0 0.0
    %1140 = vmatprep.subr.mxu0 0.0
    %1141 = vmatpush1.msra.mxu0 0.0
    %1142 = vmatprep.subr.mxu0 0.0
    %1143 = vmatpush1.msra.mxu0 0.0
    %1144 = vmatprep.subr.mxu0 0.0
    %1145 = vmatpush1.msra.mxu0 0.0
    %1146 = vmatprep.subr.mxu0 0.0
    %1147 = vmatpush1.msra.mxu0 0.0
    %1148 = vmatprep.subr.mxu0 0.0
    %1149 = vmatpush1.msra.mxu0 0.0
    %1150 = vmatprep.subr.mxu0 0.0
    %1151 = vmatpush1.msra.mxu0 0.0
    %1152 = vmatprep.subr.mxu0 0.0
    %1153 = vmatpush1.msra.mxu0 0.0
    %1154 = vmatprep.subr.mxu0 0.0
    %1155 = vmatpush1.msra.mxu0 0.0
    %1156 = vmatprep.subr.mxu0 0.0
    %1157 = vmatpush1.msra.mxu0 0.0
    %1158 = vmatprep.subr.mxu0 0.0
    %1159 = vmatpush1.msra.mxu0 0.0
    %1160 = vmatprep.subr.mxu0 0.0
    %1161 = vmatpush1.msra.mxu0 0.0
    %1162 = vmatprep.subr.mxu0 0.0
    %1163 = vmatpush1.msra.mxu0 0.0
    %1164 = vmatprep.subr.mxu0 0.0
    %1165 = vmatpush1.msra.mxu0 0.0
    %1166 = vmatprep.subr.mxu0 0.0
    %1167 = vmatpush1.msra.mxu0 0.0
    %1168 = vmatprep.subr.mxu0 0.0
    %1169 = vmatpush1.msra.mxu0 0.0
    %1170 = vmatprep.subr.mxu0 0.0
    %1171 = vmatpush1.msra.mxu0 0.0
    %1172 = vmatprep.subr.mxu0 0.0
    %1173 = vmatpush1.msra.mxu0 0.0
    %1174 = vmatprep.subr.mxu0 0.0
    %1175 = vmatpush1.msra.mxu0 0.0
    %1176 = vmatprep.subr.mxu0 0.0
    %1177 = vmatpush1.msra.mxu0 0.0
    %1178 = vmatprep.subr.mxu0 0.0
    %1179 = vmatpush1.msra.mxu0 0.0
    %1180 = vmatprep.mubr.f32.mxu0 0.0
    %1181 = vmatmul.mubr.f32.gmra.mrb[0].mxu0 %v1114
    %v1182 = vpop.f32.mrb[0].mxu0
    %v1183 = vadd.f32 0.0, %v1182
    %v1184 = vpop.f32.mrb[0].mxu0
    %1185 = vdwg.mxu0
    %v1186 = vadd.f32 %v372, %v1183
    %v1187 = vadd.f32 %v1186, %v1186
    %v1188 = vsel %vm383, %v1187, %v1186
    %v1189 = vxor.u32 %v1188, 2147483648
    %v1190 = vmul.f32 %v1189, 1.442695
    %v1191 = vpow.pop %v1190
    %v1192 = vadd.f32 %v1191, 1.0
    %v1193 = vrcp.pop %v1192
    %v1194 = vmul.f32 1.0, %v1193
    %v1195 = vadd.f32 %v1194, %v1194
    %v1196 = vsub.f32 %v1195, 1.0
    %v1197 = vsel %vm383, %v1196, %v1194
    %v1198 = vmul.f32 %v1197, %v1104
    %1200 = vrot.lane.b32.xlu0 %v1197, 64
    %v1201 = vpop.permute.xlu0 %1200
    %v1203 = vmul.f32 %v1197, %v1201
    %1205 = vrot.lane.b32.xlu0 %v1203, 32
    %v1206 = vpop.permute.xlu0 %1205
    %v1208 = vadd.f32 %v1198, %v1206
    %v1209 = vtanh.pop %v1208
    %1211 = vrot.lane.b32.xlu0 %v1209, 64
    %v1212 = vpop.permute.xlu0 %1211
    %v1214 = vmul.f32 %v1197, %v1212
    %v1215 = vld [vmem:[#allocation11] sm:$0xff]
    %v1216 = vld [vmem:[#allocation11 + $0x8] sm:$0xff]
    %v1217 = vld [vmem:[#allocation11 + $0x10] sm:$0xff]
    %v1218 = vld [vmem:[#allocation11 + $0x18] sm:$0xff]
    %v1219 = vld [vmem:[%s6] sm:$0x1]
    %v1221 = vlaneseq
    %v1222 = vshrl.u32 %v1221, 7
    %v1223 = vsub.s32 0, %v1222
    %v1224 = vrot.slane %v1219, %v1223
    %1227 = vrot.lane.b32.xlu0 %v1214, 32
    %v1228 = vpop.permute.xlu0 %1227
    %v1229 = vsel %vm384, %v1228, 0
    %1231 = vmatprep.subr.mxu0 0.0
    %1232 = vmatpush1.msra.mxu0 %v1215
    %1233 = vmatprep.subr.mxu0 0.0
    %1234 = vmatpush1.msra.mxu0 %v1216
    %1235 = vmatprep.subr.mxu0 0.0
    %1236 = vmatpush1.msra.mxu0 %v1217
    %1237 = vmatprep.subr.mxu0 0.0
    %1238 = vmatpush1.msra.mxu0 %v1218
    %1239 = vmatprep.subr.mxu0 0.0
    %1240 = vmatpush1.msra.mxu0 0.0
    %1241 = vmatprep.subr.mxu0 0.0
    %1242 = vmatpush1.msra.mxu0 0.0
    %1243 = vmatprep.subr.mxu0 0.0
    %1244 = vmatpush1.msra.mxu0 0.0
    %1245 = vmatprep.subr.mxu0 0.0
    %1246 = vmatpush1.msra.mxu0 0.0
    %1247 = vmatprep.subr.mxu0 0.0
    %1248 = vmatpush1.msra.mxu0 0.0
    %1249 = vmatprep.subr.mxu0 0.0
    %1250 = vmatpush1.msra.mxu0 0.0
    %1251 = vmatprep.subr.mxu0 0.0
    %1252 = vmatpush1.msra.mxu0 0.0
    %1253 = vmatprep.subr.mxu0 0.0
    %1254 = vmatpush1.msra.mxu0 0.0
    %1255 = vmatprep.subr.mxu0 0.0
    %1256 = vmatpush1.msra.mxu0 0.0
    %1257 = vmatprep.subr.mxu0 0.0
    %1258 = vmatpush1.msra.mxu0 0.0
    %1259 = vmatprep.subr.mxu0 0.0
    %1260 = vmatpush1.msra.mxu0 0.0
    %1261 = vmatprep.subr.mxu0 0.0
    %1262 = vmatpush1.msra.mxu0 0.0
    %1263 = vmatprep.subr.mxu0 0.0
    %1264 = vmatpush1.msra.mxu0 0.0
    %1265 = vmatprep.subr.mxu0 0.0
    %1266 = vmatpush1.msra.mxu0 0.0
    %1267 = vmatprep.subr.mxu0 0.0
    %1268 = vmatpush1.msra.mxu0 0.0
    %1269 = vmatprep.subr.mxu0 0.0
    %1270 = vmatpush1.msra.mxu0 0.0
    %1271 = vmatprep.subr.mxu0 0.0
    %1272 = vmatpush1.msra.mxu0 0.0
    %1273 = vmatprep.subr.mxu0 0.0
    %1274 = vmatpush1.msra.mxu0 0.0
    %1275 = vmatprep.subr.mxu0 0.0
    %1276 = vmatpush1.msra.mxu0 0.0
    %1277 = vmatprep.subr.mxu0 0.0
    %1278 = vmatpush1.msra.mxu0 0.0
    %1279 = vmatprep.subr.mxu0 0.0
    %1280 = vmatpush1.msra.mxu0 0.0
    %1281 = vmatprep.subr.mxu0 0.0
    %1282 = vmatpush1.msra.mxu0 0.0
    %1283 = vmatprep.subr.mxu0 0.0
    %1284 = vmatpush1.msra.mxu0 0.0
    %1285 = vmatprep.subr.mxu0 0.0
    %1286 = vmatpush1.msra.mxu0 0.0
    %1287 = vmatprep.subr.mxu0 0.0
    %1288 = vmatpush1.msra.mxu0 0.0
    %1289 = vmatprep.subr.mxu0 0.0
    %1290 = vmatpush1.msra.mxu0 0.0
    %1291 = vmatprep.subr.mxu0 0.0
    %1292 = vmatpush1.msra.mxu0 0.0
    %1293 = vmatprep.subr.mxu0 0.0
    %1294 = vmatpush1.msra.mxu0 0.0
    %1295 = vmatprep.mubr.f32.mxu0 0.0
    %1296 = vmatmul.mubr.f32.gmra.mrb[0].mxu0 %v1229
    %v1297 = vpop.f32.mrb[0].mxu0
    %v1298 = vadd.f32 %v1224, %v1297
    %v1299 = vpop.f32.mrb[0].mxu0
    %1300 = vdwg.mxu0
    %1301 = vst [vmem:[#allocation13] sm:$0xff] %v1298
    // Predicated region
    $region42: #{tpu_custom_call.1} parent=1 // pred_check
      _
    $region43: #{tpu_custom_call.1} parent=1 // pred_check_branch
      %1303 = sbr.rel (0) target = $region45
    $region44: #{tpu_custom_call.1} parent=1 // pred_region
      %s1305 = ssub.s32 128, 128
      %1306 = vsyncadd [#allocation7], %s1305
      %s1308 = sshll.u32 [#allocation13], 4
      %s1309 = int_to_ptr.vmem [resolvable:$true] %s1308
      %1311 = dma.vmem_to_hbm [thread:$0]  %s1309, 128, %s7, [#allocation7]
    $region45: #{tpu_custom_call.1} parent=1 // pred_fallthru
      _
    // Predicated region
    $region46: #{tpu_custom_call.1} parent=1 // pred_check
      _
    $region47: #{tpu_custom_call.1} parent=1 // pred_check_branch
      %1313 = sbr.rel (0) target = $region49
    $region48: #{tpu_custom_call.1} parent=1 // pred_region
      %1314 = dma.done [#allocation7], 128
    $region49: #{tpu_custom_call.1} parent=1 // pred_fallthru
      _
    %1315 = vsyncpa [#allocation6], 1
    %1316 = vsyncpa [#allocation9], 1
    %1317 = vsyncpa [#allocation12], 1
    %1318 = vsyncpa [#allocation7], 1

</llo_original>
